<compile_context>
chip_gen: v7x
topology: tpu7x:2x2x1
jax: 0.10.0
libtpu: 0.0.40
codegen_flags: <defaults>
</compile_context>

<pallas_src>
import numpy as np
import jax
import jax.numpy as jnp
from jax.experimental import pallas as pl
from jax.experimental.pallas import tpu as pltpu

NV = 778          # MANO vertices
NVP = 896         # NV padded to 7*128 (lane-dense, unmasked tiles)
NV3 = 3 * NVP     # flattened xyz-blocked vertex axis
NJ = 16           # MANO joints
NS = 10           # shape params
NPF = 135         # pose-feature dim = 15 joints * 9 rotmat entries
NF = NS + NPF + 1  # fused feature dim: [shape | pose_feature | 1]

# MANO kinematic tree (parent of each of the 16 joints); joints 1..15 are
# 5 fingers x 3 joints in consecutive order, all chains rooted at joint 0.
PARENTS = np.array([0, 0, 1, 2, 0, 4, 5, 0, 7, 8, 0, 10, 11, 0, 13, 14],
                   dtype=np.int32)
TIPS = np.array([745, 317, 444, 556, 673], dtype=np.int32)
REORDER = np.array([0, 13, 14, 15, 16, 1, 2, 3, 17, 4, 5, 6, 18,
                    10, 11, 12, 19, 7, 8, 9, 20], dtype=np.int32)


# ----------------------------------------------------------------------------
# Fused Pallas kernel: blendshapes + LBS skinning
# ----------------------------------------------------------------------------
def _mano_kernel(feat_ref, a_ref, dirs_ref, wT_ref, out_ref):
    # feat_ref : (TB, NF)       bf16  [shape | pose_feature | 1]
    # a_ref    : (12, TB, NJ)   f32   per-joint transforms, entries-major
    #                                 (global rotation & translation folded in)
    # dirs_ref : (NF, 3*NVP)    bf16  stacked [shapedirs; posedirs; template]
    # wT_ref   : (NJ, NVP)      f32   lbs_weights^T (padded vertex cols zero)
    # out_ref  : (TB, 3*NVP)    f32   final vertices, component-blocked
    tb = feat_ref.shape[0]

    # One fused matmul: template + shape blendshapes + pose correctives.
    v = jnp.dot(feat_ref[...], dirs_ref[...],
                preferred_element_type=jnp.float32)        # (TB, 3*NVP)
    vx = v[:, 0 * NVP:1 * NVP]
    vy = v[:, 1 * NVP:2 * NVP]
    vz = v[:, 2 * NVP:3 * NVP]

    # Per-vertex skinning transforms, 12 entries only, one MXU pass:
    # (12*TB, NJ) @ (NJ, NVP) -> (12, TB, NVP); leading-axis slices are
    # contiguous lane-dense slabs (no sublane-strided extraction).
    a_flat = a_ref[...].reshape(12 * tb, NJ)
    T = jnp.dot(a_flat, wT_ref[...],
                preferred_element_type=jnp.float32).reshape(12, tb, NVP)

    for r in range(3):
        out_ref[:, r * NVP:(r + 1) * NVP] = (T[4 * r + 0] * vx
                                             + T[4 * r + 1] * vy
                                             + T[4 * r + 2] * vz
                                             + T[4 * r + 3])


_COMPILER_PARAMS = pltpu.CompilerParams(
    dimension_semantics=("parallel",),
    vmem_limit_bytes=32 * 1024 * 1024)   # ~12.5 MiB used at TB=128; safe on v5e/v6e/v7x


def _mano_call(feat, a_em, dirs, wT, tb):
    bp = feat.shape[0]
    # TODO(synk): constant blocks (dirs, wT) could use pipeline_mode=pl.Buffered(1)
    # to skip double-buffering (~0.8 MiB VMEM); skipped for lowering safety.
    return pl.pallas_call(
        _mano_kernel,
        out_shape=jax.ShapeDtypeStruct((bp, NV3), jnp.float32),
        grid_spec=pltpu.PrefetchScalarGridSpec(
            num_scalar_prefetch=0, grid=(bp // tb,),
            in_specs=[pl.BlockSpec((tb, NF), lambda b: (b, 0)),
                      pl.BlockSpec((12, tb, NJ), lambda b: (0, b, 0)),
                      pl.BlockSpec((NF, NV3), lambda b: (0, 0)),
                      pl.BlockSpec((NJ, NVP), lambda b: (0, 0))],
            out_specs=pl.BlockSpec((tb, NV3), lambda b: (b, 0))),
        compiler_params=_COMPILER_PARAMS,
    )(feat, a_em, dirs, wT)


# ----------------------------------------------------------------------------
# small helpers
# ----------------------------------------------------------------------------
def _round8(x):
    return ((x + 7) // 8) * 8


def _pick_tb(B):
    """Batch block size: multiple of 8, up to 128; keep >=2 grid steps when
    the batch is big enough so both v7x TensorCores get work."""
    tb_max = 128
    b8 = _round8(B)
    if b8 <= 8:
        return 8
    if b8 >= 2 * tb_max:
        return tb_max
    return min(tb_max, _round8((b8 + 1) // 2))


def _pad_last(a, target):
    pad = target - a.shape[-1]
    if pad == 0:
        return a
    widths = [(0, 0)] * (a.ndim - 1) + [(0, pad)]
    return jnp.pad(a, widths)


def _pad_batch(a, bp, axis=0):
    if a.shape[axis] == bp:
        return a
    widths = [(0, 0)] * a.ndim
    widths[axis] = (0, bp - a.shape[axis])
    return jnp.pad(a, widths)


# ----------------------------------------------------------------------------
# JAX glue: kinematic chain of 16 tiny 4x4 transforms (not a Pallas hot path)
# ----------------------------------------------------------------------------
def _rigid_transforms(J, finger_rmt):
    # TODO(synk): this 16x(4x4) sequential chain is scalar-sized; kept in JAX.
    B = J.shape[0]
    f32 = J.dtype
    I3 = jnp.eye(3, dtype=f32)
    # apply_global_last=True -> root rotation is identity
    R = jnp.concatenate([jnp.broadcast_to(I3, (B, 1, 3, 3)), finger_rmt], axis=1)
    parents = jnp.asarray(PARENTS)
    J_rel = J.at[:, 1:].add(-J[:, parents[1:]])
    top = jnp.concatenate([R, J_rel[..., None]], axis=-1)             # (B,16,3,4)
    bottom = jnp.broadcast_to(jnp.array([0., 0., 0., 1.], dtype=f32),
                              (B, NJ, 1, 4))
    M = jnp.concatenate([top, bottom], axis=-2)                       # (B,16,4,4)
    root = M[:, :1]
    fing = M[:, 1:].reshape(B, 5, 3, 4, 4)
    f0 = jnp.einsum('bij,bfjk->bfik', root[:, 0], fing[:, :, 0])
    f1 = jnp.einsum('bfij,bfjk->bfik', f0, fing[:, :, 1])
    f2 = jnp.einsum('bfij,bfjk->bfik', f1, fing[:, :, 2])
    fM = jnp.stack([f0, f1, f2], axis=2).reshape(B, 15, 4, 4)
    M = jnp.concatenate([root, fM], axis=1)                           # (B,16,4,4)
    J_transformed = M[:, :, :3, 3]
    t_corr = M[:, :, :3, 3] - jnp.einsum('bjrc,bjc->bjr', M[:, :, :3, :3], J)
    A = M.at[:, :, :3, 3].set(t_corr)
    return A, J_transformed


# ----------------------------------------------------------------------------
# Full forward (Pallas) and pure-JAX reference
# ----------------------------------------------------------------------------
def mano_forward_pallas(global_rmt, finger_rmt, shape, trans, consts):
    B = shape.shape[0]
    f32 = jnp.float32
    g = global_rmt.reshape(B, 3, 3).astype(f32)
    finger_rmt = finger_rmt.astype(f32)
    shape = shape.astype(f32)
    if trans is None:
        trans = jnp.zeros((B, 3), f32)
    trans = trans.astype(f32)

    # --- constants: fused blendshape matrix (bf16), lbs weights (f32) ---------
    sdirs_flat = _pad_last(jnp.transpose(consts['shapedirs'].astype(f32),
                                         (2, 1, 0)), NVP).reshape(NS, NV3)
    pdirs_flat = _pad_last(jnp.transpose(consts['posedirs'].astype(f32),
                                         (0, 2, 1)), NVP).reshape(NPF, NV3)
    tmpl_flat = _pad_last(consts['verts_template'].astype(f32).T,
                          NVP).reshape(1, NV3)
    dirs = jnp.concatenate([sdirs_flat, pdirs_flat, tmpl_flat],
                           axis=0).astype(jnp.bfloat16)                # (NF, NV3)
    wT = _pad_last(consts['lbs_weights'].astype(f32).T, NVP)           # (NJ, NVP)

    # --- joint regression reduced to a tiny (B,10)@(10,48) matmul (JAX glue) --
    jreg = consts['J_regressor'].astype(f32)
    jt = jnp.einsum('jv,vk->jk', jreg, consts['verts_template'].astype(f32))
    jdirs = jnp.einsum('jv,vkl->ljk', jreg, consts['shapedirs'].astype(f32))
    J = jt[None] + jnp.einsum('bl,ljk->bjk', shape, jdirs)             # (B,NJ,3)

    I3 = jnp.eye(3, dtype=f32)
    pose_feature = (finger_rmt - I3).reshape(B, NPF)
    feat = jnp.concatenate([shape, pose_feature, jnp.ones((B, 1), f32)],
                           axis=1)                                     # (B, NF)

    # tiny kinematic chain in JAX (now runs BEFORE the single Pallas kernel)
    A, J_transformed = _rigid_transforms(J, finger_rmt)                # (B,16,4,4)

    # Fold the global rotation (applied last) and the translation into A.
    # Valid because each row of lbs_weights sums to 1.
    gR = jnp.einsum('bkl,bjlm->bjkm', g, A[:, :, :3, :3])              # (B,16,3,3)
    gt = jnp.einsum('bkl,bjl->bjk', g, A[:, :, :3, 3]) + trans[:, None, :]
    A12 = jnp.concatenate([gR, gt[..., None]], axis=-1).reshape(B, NJ, 12)
    A_em = jnp.transpose(A12, (2, 0, 1))                               # (12,B,NJ)

    tb = _pick_tb(B)
    bp = ((B + tb - 1) // tb) * tb

    feat_p = _pad_batch(feat, bp).astype(jnp.bfloat16)                 # (bp, NF)
    a_p = _pad_batch(A_em, bp, axis=1)                                 # (12,bp,NJ)

    # single fused kernel: blendshapes + LBS skinning, vertices never hit HBM
    # between the two stages.
    out_flat = _mano_call(feat_p, a_p, dirs, wT, tb)                   # (bp, 3NVP)
    verts = jnp.transpose(out_flat[:B].reshape(B, 3, NVP)[:, :, :NV],
                          (0, 2, 1))                                   # (B, NV, 3)

    joints = jnp.einsum('bjk,blk->bjl', J_transformed, g) + trans[:, None, :]
    joints = jnp.concatenate([joints, verts[:, TIPS, :]], axis=1)      # (B, 21, 3)
    joints = joints[:, REORDER, :]
    return verts, joints


def mano_forward_ref(global_rmt, finger_rmt, shape, trans, consts):
    B = shape.shape[0]
    f32 = jnp.float32
    g = global_rmt.reshape(B, 3, 3).astype(f32)
    finger_rmt = finger_rmt.astype(f32)
    I3 = jnp.eye(3, dtype=f32)
    V = consts['verts_template'][None] + jnp.einsum('bl,vkl->bvk',
                                                    shape, consts['shapedirs'])
    J = jnp.einsum('bvk,jv->bjk', V, consts['J_regressor'])
    pose_feature = (finger_rmt - I3).reshape(B, NPF)
    V = V + (pose_feature @ consts['posedirs'].reshape(NPF, NV * 3)).reshape(B, NV, 3)
    A, J_t = _rigid_transforms(J, finger_rmt)
    T = jnp.einsum('vj,bje->bve', consts['lbs_weights'],
                   A.reshape(B, NJ, 16)).reshape(B, NV, 4, 4)
    V_t = jnp.einsum('bvrc,bvc->bvr', T[..., :3, :3], V) + T[..., :3, 3]
    V_t = jnp.einsum('bvk,blk->bvl', V_t, g)
    J_t = jnp.einsum('bjk,blk->bjl', J_t, g)
    verts = V_t + trans[:, None, :]
    joints = J_t + trans[:, None, :]
    joints = jnp.concatenate([joints, verts[:, TIPS, :]], axis=1)
    joints = joints[:, REORDER, :]
    return verts, joints


def _rodrigues(rotvec):
    angle = jnp.linalg.norm(rotvec + 1e-8, axis=-1, keepdims=True)
    axis = rotvec / (angle + 1e-8)
    c = jnp.cos(angle)[..., None]
    s = jnp.sin(angle)[..., None]
    x, y, z = axis[..., 0], axis[..., 1], axis[..., 2]
    zeros = jnp.zeros_like(x)
    K = jnp.stack([zeros, -z, y, z, zeros, -x, -y, x, zeros],
                  axis=-1).reshape(rotvec.shape[:-1] + (3, 3))
    I = jnp.eye(3, dtype=rotvec.dtype)
    return I + s * K + (1.0 - c) * (K @ K)


if __name__ == "__main__":
    key = jax.random.PRNGKey(0)
    ks = jax.random.split(key, 9)
    B = 2

    # Deterministic synthetic MANO buffers (same shapes the module registers).
    consts = dict(
        verts_template=0.1 * jax.random.normal(ks[0], (NV, 3), jnp.float32),
        shapedirs=0.01 * jax.random.normal(ks[1], (NV, 3, NS), jnp.float32),
        posedirs=0.001 * jax.random.normal(ks[2], (NPF, NV, 3), jnp.float32),
        J_regressor=jax.nn.softmax(
            4.0 * jax.random.normal(ks[3], (NJ, NV), jnp.float32), axis=-1),
        lbs_weights=jax.nn.softmax(
            4.0 * jax.random.normal(ks[4], (NV, NJ), jnp.float32), axis=-1),
    )

    # Deterministic example inputs (rotation matrices from random axis-angles).
    global_rmt = _rodrigues(0.5 * jax.random.normal(ks[5], (B, 1, 3), jnp.float32))
    finger_rmt = _rodrigues(0.3 * jax.random.normal(ks[6], (B, 15, 3), jnp.float32))
    shape = jax.random.normal(ks[7], (B, NS), jnp.float32)
    trans = 0.1 * jax.random.normal(ks[8], (B, 3), jnp.float32)

    verts, joints = jax.jit(mano_forward_pallas)(global_rmt, finger_rmt,
                                                 shape, trans, consts)
    jax.block_until_ready((verts, joints))

    v_ref, j_ref = jax.jit(mano_forward_ref)(global_rmt, finger_rmt,
                                             shape, trans, consts)
    jax.block_until_ready((v_ref, j_ref))

    assert verts.shape == (B, NV, 3) and joints.shape == (B, 21, 3)
    np.testing.assert_allclose(np.asarray(verts), np.asarray(v_ref),
                               rtol=2e-2, atol=2e-3)
    np.testing.assert_allclose(np.asarray(joints), np.asarray(j_ref),
                               rtol=2e-2, atol=2e-3)
    print("KERNEL_OK")
</pallas_src>

<mosaic_0001>
module attributes {stable_mosaic.version = 11 : i64} {
  func.func @_mano_kernel(%arg0: i32, %arg1: memref<8x146xbf16, #tpu.memory_space<vmem>>, %arg2: memref<12x8x16xf32, #tpu.memory_space<vmem>>, %arg3: memref<146x2688xbf16, #tpu.memory_space<vmem>>, %arg4: memref<16x896xf32, #tpu.memory_space<vmem>>, %arg5: memref<8x2688xf32, #tpu.memory_space<vmem>>) attributes {dimension_semantics = [#tpu.dimension_semantics<parallel>], iteration_bounds = array<i64: 1>, scalar_prefetch = 0 : i64, scratch_operands = 0 : i64, tpu.core_type = #tpu.core_type<tc>, window_params = [{transform_indices = @transform_0, window_bounds = array<i64: 8, 146>}, {transform_indices = @transform_1, window_bounds = array<i64: 12, 8, 16>}, {pipeline_mode = #tpu.pipeline_mode<synchronous>, transform_indices = @transform_2, window_bounds = array<i64: 146, 2688>}, {pipeline_mode = #tpu.pipeline_mode<synchronous>, transform_indices = @transform_3, window_bounds = array<i64: 16, 896>}, {transform_indices = @transform_4, window_bounds = array<i64: 8, 2688>}]} {
    %c0 = arith.constant 0 : index
    %c0_0 = arith.constant 0 : index
    %0 = vector.load %arg1[%c0, %c0_0] : memref<8x146xbf16, #tpu.memory_space<vmem>>, vector<8x146xbf16>
    %c0_1 = arith.constant 0 : index
    %c0_2 = arith.constant 0 : index
    %1 = vector.load %arg3[%c0_1, %c0_2] : memref<146x2688xbf16, #tpu.memory_space<vmem>>, vector<146x2688xbf16>
    %cst = arith.constant dense<0.000000e+00> : vector<8x2688xf32>
    %2 = tpu.matmul %0, %1, %cst {dimension_numbers = #tpu.dot_dimension_numbers<[1], [0], [0], [1], [0, 0, 1, 1], [], []>} : vector<8x146xbf16>, vector<146x2688xbf16>, vector<8x2688xf32> -> vector<8x2688xf32>
    %3 = vector.extract_strided_slice %2 {offsets = [0, 0], sizes = [8, 896], strides = [1, 1]} : vector<8x2688xf32> to vector<8x896xf32>
    %4 = vector.extract_strided_slice %2 {offsets = [0, 896], sizes = [8, 896], strides = [1, 1]} : vector<8x2688xf32> to vector<8x896xf32>
    %5 = vector.extract_strided_slice %2 {offsets = [0, 1792], sizes = [8, 896], strides = [1, 1]} : vector<8x2688xf32> to vector<8x896xf32>
    %c0_3 = arith.constant 0 : index
    %c0_4 = arith.constant 0 : index
    %c0_5 = arith.constant 0 : index
    %6 = vector.load %arg2[%c0_3, %c0_4, %c0_5] : memref<12x8x16xf32, #tpu.memory_space<vmem>>, vector<12x8x16xf32>
    %7 = vector.shape_cast %6 : vector<12x8x16xf32> to vector<96x16xf32>
    %c0_6 = arith.constant 0 : index
    %c0_7 = arith.constant 0 : index
    %8 = vector.load %arg4[%c0_6, %c0_7] : memref<16x896xf32, #tpu.memory_space<vmem>>, vector<16x896xf32>
    %cst_8 = arith.constant dense<0.000000e+00> : vector<96x896xf32>
    %9 = tpu.matmul %7, %8, %cst_8 {dimension_numbers = #tpu.dot_dimension_numbers<[1], [0], [0], [1], [0, 0, 1, 1], [], []>} : vector<96x16xf32>, vector<16x896xf32>, vector<96x896xf32> -> vector<96x896xf32>
    %10 = vector.shape_cast %9 : vector<96x896xf32> to vector<12x8x896xf32>
    %11 = vector.extract_strided_slice %10 {offsets = [0, 0, 0], sizes = [1, 8, 896], strides = [1, 1, 1]} : vector<12x8x896xf32> to vector<1x8x896xf32>
    %12 = vector.shape_cast %11 : vector<1x8x896xf32> to vector<8x896xf32>
    %13 = arith.mulf %12, %3 : vector<8x896xf32>
    %14 = vector.extract_strided_slice %10 {offsets = [1, 0, 0], sizes = [1, 8, 896], strides = [1, 1, 1]} : vector<12x8x896xf32> to vector<1x8x896xf32>
    %15 = vector.shape_cast %14 : vector<1x8x896xf32> to vector<8x896xf32>
    %16 = arith.mulf %15, %4 : vector<8x896xf32>
    %17 = arith.addf %13, %16 : vector<8x896xf32>
    %18 = vector.extract_strided_slice %10 {offsets = [2, 0, 0], sizes = [1, 8, 896], strides = [1, 1, 1]} : vector<12x8x896xf32> to vector<1x8x896xf32>
    %19 = vector.shape_cast %18 : vector<1x8x896xf32> to vector<8x896xf32>
    %20 = arith.mulf %19, %5 : vector<8x896xf32>
    %21 = arith.addf %17, %20 : vector<8x896xf32>
    %22 = vector.extract_strided_slice %10 {offsets = [3, 0, 0], sizes = [1, 8, 896], strides = [1, 1, 1]} : vector<12x8x896xf32> to vector<1x8x896xf32>
    %23 = vector.shape_cast %22 : vector<1x8x896xf32> to vector<8x896xf32>
    %24 = arith.addf %21, %23 : vector<8x896xf32>
    %c0_9 = arith.constant 0 : index
    %c0_10 = arith.constant 0 : index
    %25 = vector.load %arg5[%c0_9, %c0_10] : memref<8x2688xf32, #tpu.memory_space<vmem>>, vector<8x896xf32>
    tpu.vector_store %arg5[%c0_9, %c0_10], %24 {strides = array<i32>} : memref<8x2688xf32, #tpu.memory_space<vmem>>, vector<8x896xf32>,
    %26 = vector.extract_strided_slice %10 {offsets = [4, 0, 0], sizes = [1, 8, 896], strides = [1, 1, 1]} : vector<12x8x896xf32> to vector<1x8x896xf32>
    %27 = vector.shape_cast %26 : vector<1x8x896xf32> to vector<8x896xf32>
    %28 = arith.mulf %27, %3 : vector<8x896xf32>
    %29 = vector.extract_strided_slice %10 {offsets = [5, 0, 0], sizes = [1, 8, 896], strides = [1, 1, 1]} : vector<12x8x896xf32> to vector<1x8x896xf32>
    %30 = vector.shape_cast %29 : vector<1x8x896xf32> to vector<8x896xf32>
    %31 = arith.mulf %30, %4 : vector<8x896xf32>
    %32 = arith.addf %28, %31 : vector<8x896xf32>
    %33 = vector.extract_strided_slice %10 {offsets = [6, 0, 0], sizes = [1, 8, 896], strides = [1, 1, 1]} : vector<12x8x896xf32> to vector<1x8x896xf32>
    %34 = vector.shape_cast %33 : vector<1x8x896xf32> to vector<8x896xf32>
    %35 = arith.mulf %34, %5 : vector<8x896xf32>
    %36 = arith.addf %32, %35 : vector<8x896xf32>
    %37 = vector.extract_strided_slice %10 {offsets = [7, 0, 0], sizes = [1, 8, 896], strides = [1, 1, 1]} : vector<12x8x896xf32> to vector<1x8x896xf32>
    %38 = vector.shape_cast %37 : vector<1x8x896xf32> to vector<8x896xf32>
    %39 = arith.addf %36, %38 : vector<8x896xf32>
    %c0_11 = arith.constant 0 : index
    %c896 = arith.constant 896 : index
    %40 = vector.load %arg5[%c0_11, %c896] : memref<8x2688xf32, #tpu.memory_space<vmem>>, vector<8x896xf32>
    tpu.vector_store %arg5[%c0_11, %c896], %39 {strides = array<i32>} : memref<8x2688xf32, #tpu.memory_space<vmem>>, vector<8x896xf32>,
    %41 = vector.extract_strided_slice %10 {offsets = [8, 0, 0], sizes = [1, 8, 896], strides = [1, 1, 1]} : vector<12x8x896xf32> to vector<1x8x896xf32>
    %42 = vector.shape_cast %41 : vector<1x8x896xf32> to vector<8x896xf32>
    %43 = arith.mulf %42, %3 : vector<8x896xf32>
    %44 = vector.extract_strided_slice %10 {offsets = [9, 0, 0], sizes = [1, 8, 896], strides = [1, 1, 1]} : vector<12x8x896xf32> to vector<1x8x896xf32>
    %45 = vector.shape_cast %44 : vector<1x8x896xf32> to vector<8x896xf32>
    %46 = arith.mulf %45, %4 : vector<8x896xf32>
    %47 = arith.addf %43, %46 : vector<8x896xf32>
    %48 = vector.extract_strided_slice %10 {offsets = [10, 0, 0], sizes = [1, 8, 896], strides = [1, 1, 1]} : vector<12x8x896xf32> to vector<1x8x896xf32>
    %49 = vector.shape_cast %48 : vector<1x8x896xf32> to vector<8x896xf32>
    %50 = arith.mulf %49, %5 : vector<8x896xf32>
    %51 = arith.addf %47, %50 : vector<8x896xf32>
    %52 = vector.extract_strided_slice %10 {offsets = [11, 0, 0], sizes = [1, 8, 896], strides = [1, 1, 1]} : vector<12x8x896xf32> to vector<1x8x896xf32>
    %53 = vector.shape_cast %52 : vector<1x8x896xf32> to vector<8x896xf32>
    %54 = arith.addf %51, %53 : vector<8x896xf32>
    %c0_12 = arith.constant 0 : index
    %c1792 = arith.constant 1792 : index
    %55 = vector.load %arg5[%c0_12, %c1792] : memref<8x2688xf32, #tpu.memory_space<vmem>>, vector<8x896xf32>
    tpu.vector_store %arg5[%c0_12, %c1792], %54 {strides = array<i32>} : memref<8x2688xf32, #tpu.memory_space<vmem>>, vector<8x896xf32>,
    return
  }
  func.func @transform_0(%arg0: i32) -> (i32, i32) {
    %c0_i32 = arith.constant 0 : i32
    %c0_i32_0 = arith.constant 0 : i32
    return %arg0, %c0_i32 : i32, i32
  }
  func.func @transform_1(%arg0: i32) -> (i32, i32, i32) {
    %c0_i32 = arith.constant 0 : i32
    %c0_i32_0 = arith.constant 0 : i32
    %c0_i32_1 = arith.constant 0 : i32
    return %c0_i32, %arg0, %c0_i32_0 : i32, i32, i32
  }
  func.func @transform_2(%arg0: i32) -> (i32, i32) {
    %c0_i32 = arith.constant 0 : i32
    %c0_i32_0 = arith.constant 0 : i32
    %c0_i32_1 = arith.constant 0 : i32
    return %c0_i32, %c0_i32_0 : i32, i32
  }
  func.func @transform_3(%arg0: i32) -> (i32, i32) {
    %c0_i32 = arith.constant 0 : i32
    %c0_i32_0 = arith.constant 0 : i32
    %c0_i32_1 = arith.constant 0 : i32
    return %c0_i32, %c0_i32_0 : i32, i32
  }
  func.func @transform_4(%arg0: i32) -> (i32, i32) {
    %c0_i32 = arith.constant 0 : i32
    %c0_i32_0 = arith.constant 0 : i32
    return %arg0, %c0_i32 : i32, i32
  }
}

</mosaic_0001>

<llo_original>
// kernel: mano_forward_pallas.1
$region0: #{mano_forward_pallas.1}
  #allocation0 [shape = 'u32[]', space=smem, size = 0x4, offset = 0x4, fixed_abs, tag = 'smem constant byte address 0x4 - core index']
  #allocation1 [shape = 'u32[144,128]{1,0:T(1,128)}', space=vmem, size = 0x12000, scoped, tag = 'internal scratch']
  %s0 = inlined_call_operand.vmem [shape: bf16[8,146], index: 0, kind: input, shape index: {}]
  %s1 = inlined_call_operand.vmem [shape: f32[12,8,16], index: 1, kind: input, shape index: {}]
  %s2 = inlined_call_operand.vmem [shape: bf16[146,2688], index: 2, kind: input, shape index: {}]
  %s3 = inlined_call_operand.vmem [shape: f32[16,896], index: 3, kind: input, shape index: {}]
  %s4 = inlined_call_operand.vmem [shape: f32[8,2688], index: 4, kind: output, shape index: {}]
  %s5 = sld [smem:[#allocation0]]
  $region26: #{mano_forward_pallas.1} parent=0
    _
  %s7 = ssub.s32 1, %s5
  %s8 = scalar_select 0, %s7, %s5
  // Predicated region
  $region2: #{mano_forward_pallas.1} parent=0 // pred_check
    _
  $region3: #{mano_forward_pallas.1} parent=0 // pred_check_branch
    %10 = sbr.rel (0) target = $region5
  $region4: #{mano_forward_pallas.1} parent=0 // pred_region
    _
  $region5: #{mano_forward_pallas.1} parent=0 // pred_fallthru
    _
  // Predicated region
  $region6: #{mano_forward_pallas.1} parent=0 // pred_check
    _
  $region7: #{mano_forward_pallas.1} parent=0 // pred_check_branch
    %12 = sbr.rel (0) target = $region9
  $region8: #{mano_forward_pallas.1} parent=0 // pred_region
    _
  $region9: #{mano_forward_pallas.1} parent=0 // pred_fallthru
    _
  // Predicated region
  $region10: #{mano_forward_pallas.1} parent=0 // pred_check
    _
  $region11: #{mano_forward_pallas.1} parent=0 // pred_check_branch
    %14 = sbr.rel (0) target = $region13
  $region12: #{mano_forward_pallas.1} parent=0 // pred_region
    _
  $region13: #{mano_forward_pallas.1} parent=0 // pred_fallthru
    _
  // Predicated region
  $region14: #{mano_forward_pallas.1} parent=0 // pred_check
    _
  $region15: #{mano_forward_pallas.1} parent=0 // pred_check_branch
    %16 = sbr.rel (0) target = $region17
  $region16: #{mano_forward_pallas.1} parent=0 // pred_region
    _
  $region17: #{mano_forward_pallas.1} parent=0 // pred_fallthru
    _
  %v18 = vld [vmem:[%s0] sm:$0xff]
  %v19 = vld [vmem:[%s2] sm:$0xff]
  %v20 = vld [vmem:[%s2 + $0x8] sm:$0xff]
  %v21 = vld [vmem:[%s2 + $0x10] sm:$0xff]
  %v22 = vld [vmem:[%s2 + $0x18] sm:$0xff]
  %v23 = vld [vmem:[%s2 + $0x20] sm:$0xff]
  %v24 = vld [vmem:[%s2 + $0x28] sm:$0xff]
  %v25 = vld [vmem:[%s2 + $0x30] sm:$0xff]
  %v26 = vld [vmem:[%s2 + $0x38] sm:$0xff]
  %v27 = vld [vmem:[%s2 + $0x40] sm:$0xff]
  %v28 = vld [vmem:[%s2 + $0x48] sm:$0xff]
  %v29 = vld [vmem:[%s2 + $0x50] sm:$0xf]
  %v30 = vld [vmem:[%s2 + $0x54] sm:$0xff]
  %v31 = vld [vmem:[%s2 + $0x5c] sm:$0xff]
  %v32 = vld [vmem:[%s2 + $0x64] sm:$0xff]
  %v33 = vld [vmem:[%s2 + $0x6c] sm:$0xff]
  %v34 = vld [vmem:[%s2 + $0x74] sm:$0xff]
  %v35 = vld [vmem:[%s2 + $0x7c] sm:$0xff]
  %v36 = vld [vmem:[%s2 + $0x84] sm:$0xff]
  %v37 = vld [vmem:[%s2 + $0x8c] sm:$0xff]
  %v38 = vld [vmem:[%s2 + $0x94] sm:$0xff]
  %v39 = vld [vmem:[%s2 + $0x9c] sm:$0xff]
  %v40 = vld [vmem:[%s2 + $0xa4] sm:$0xf]
  %v41 = vld [vmem:[%s2 + $0xa8] sm:$0xff]
  %v42 = vld [vmem:[%s2 + $0xb0] sm:$0xff]
  %v43 = vld [vmem:[%s2 + $0xb8] sm:$0xff]
  %v44 = vld [vmem:[%s2 + $0xc0] sm:$0xff]
  %v45 = vld [vmem:[%s2 + $0xc8] sm:$0xff]
  %v46 = vld [vmem:[%s2 + $0xd0] sm:$0xff]
  %v47 = vld [vmem:[%s2 + $0xd8] sm:$0xff]
  %v48 = vld [vmem:[%s2 + $0xe0] sm:$0xff]
  %v49 = vld [vmem:[%s2 + $0xe8] sm:$0xff]
  %v50 = vld [vmem:[%s2 + $0xf0] sm:$0xff]
  %v51 = vld [vmem:[%s2 + $0xf8] sm:$0xf]
  %v52 = vld [vmem:[%s2 + $0xfc] sm:$0xff]
  %v53 = vld [vmem:[%s2 + $0x104] sm:$0xff]
  %v54 = vld [vmem:[%s2 + $0x10c] sm:$0xff]
  %v55 = vld [vmem:[%s2 + $0x114] sm:$0xff]
  %v56 = vld [vmem:[%s2 + $0x11c] sm:$0xff]
  %v57 = vld [vmem:[%s2 + $0x124] sm:$0xff]
  %v58 = vld [vmem:[%s2 + $0x12c] sm:$0xff]
  %v59 = vld [vmem:[%s2 + $0x134] sm:$0xff]
  %v60 = vld [vmem:[%s2 + $0x13c] sm:$0xff]
  %v61 = vld [vmem:[%s2 + $0x144] sm:$0xff]
  %v62 = vld [vmem:[%s2 + $0x14c] sm:$0xf]
  %v63 = vld [vmem:[%s2 + $0x150] sm:$0xff]
  %v64 = vld [vmem:[%s2 + $0x158] sm:$0xff]
  %v65 = vld [vmem:[%s2 + $0x160] sm:$0xff]
  %v66 = vld [vmem:[%s2 + $0x168] sm:$0xff]
  %v67 = vld [vmem:[%s2 + $0x170] sm:$0xff]
  %v68 = vld [vmem:[%s2 + $0x178] sm:$0xff]
  %v69 = vld [vmem:[%s2 + $0x180] sm:$0xff]
  %v70 = vld [vmem:[%s2 + $0x188] sm:$0xff]
  %v71 = vld [vmem:[%s2 + $0x190] sm:$0xff]
  %v72 = vld [vmem:[%s2 + $0x198] sm:$0xff]
  %v73 = vld [vmem:[%s2 + $0x1a0] sm:$0xf]
  %v74 = vld [vmem:[%s2 + $0x1a4] sm:$0xff]
  %v75 = vld [vmem:[%s2 + $0x1ac] sm:$0xff]
  %v76 = vld [vmem:[%s2 + $0x1b4] sm:$0xff]
  %v77 = vld [vmem:[%s2 + $0x1bc] sm:$0xff]
  %v78 = vld [vmem:[%s2 + $0x1c4] sm:$0xff]
  %v79 = vld [vmem:[%s2 + $0x1cc] sm:$0xff]
  %v80 = vld [vmem:[%s2 + $0x1d4] sm:$0xff]
  %v81 = vld [vmem:[%s2 + $0x1dc] sm:$0xff]
  %v82 = vld [vmem:[%s2 + $0x1e4] sm:$0xff]
  %v83 = vld [vmem:[%s2 + $0x1ec] sm:$0xff]
  %v84 = vld [vmem:[%s2 + $0x1f4] sm:$0xf]
  %v85 = vld [vmem:[%s2 + $0x1f8] sm:$0xff]
  %v86 = vld [vmem:[%s2 + $0x200] sm:$0xff]
  %v87 = vld [vmem:[%s2 + $0x208] sm:$0xff]
  %v88 = vld [vmem:[%s2 + $0x210] sm:$0xff]
  %v89 = vld [vmem:[%s2 + $0x218] sm:$0xff]
  %v90 = vld [vmem:[%s2 + $0x220] sm:$0xff]
  %v91 = vld [vmem:[%s2 + $0x228] sm:$0xff]
  %v92 = vld [vmem:[%s2 + $0x230] sm:$0xff]
  %v93 = vld [vmem:[%s2 + $0x238] sm:$0xff]
  %v94 = vld [vmem:[%s2 + $0x240] sm:$0xff]
  %v95 = vld [vmem:[%s2 + $0x248] sm:$0xf]
  %v96 = vld [vmem:[%s2 + $0x24c] sm:$0xff]
  %v97 = vld [vmem:[%s2 + $0x254] sm:$0xff]
  %v98 = vld [vmem:[%s2 + $0x25c] sm:$0xff]
  %v99 = vld [vmem:[%s2 + $0x264] sm:$0xff]
  %v100 = vld [vmem:[%s2 + $0x26c] sm:$0xff]
  %v101 = vld [vmem:[%s2 + $0x274] sm:$0xff]
  %v102 = vld [vmem:[%s2 + $0x27c] sm:$0xff]
  %v103 = vld [vmem:[%s2 + $0x284] sm:$0xff]
  %v104 = vld [vmem:[%s2 + $0x28c] sm:$0xff]
  %v105 = vld [vmem:[%s2 + $0x294] sm:$0xff]
  %v106 = vld [vmem:[%s2 + $0x29c] sm:$0xf]
  %v107 = vld [vmem:[%s2 + $0x2a0] sm:$0xff]
  %v108 = vld [vmem:[%s2 + $0x2a8] sm:$0xff]
  %v109 = vld [vmem:[%s2 + $0x2b0] sm:$0xff]
  %v110 = vld [vmem:[%s2 + $0x2b8] sm:$0xff]
  %v111 = vld [vmem:[%s2 + $0x2c0] sm:$0xff]
  %v112 = vld [vmem:[%s2 + $0x2c8] sm:$0xff]
  %v113 = vld [vmem:[%s2 + $0x2d0] sm:$0xff]
  %v114 = vld [vmem:[%s2 + $0x2d8] sm:$0xff]
  %v115 = vld [vmem:[%s2 + $0x2e0] sm:$0xff]
  %v116 = vld [vmem:[%s2 + $0x2e8] sm:$0xff]
  %v117 = vld [vmem:[%s2 + $0x2f0] sm:$0xf]
  %v118 = vld [vmem:[%s2 + $0x2f4] sm:$0xff]
  %v119 = vld [vmem:[%s2 + $0x2fc] sm:$0xff]
  %v120 = vld [vmem:[%s2 + $0x304] sm:$0xff]
  %v121 = vld [vmem:[%s2 + $0x30c] sm:$0xff]
  %v122 = vld [vmem:[%s2 + $0x314] sm:$0xff]
  %v123 = vld [vmem:[%s2 + $0x31c] sm:$0xff]
  %v124 = vld [vmem:[%s2 + $0x324] sm:$0xff]
  %v125 = vld [vmem:[%s2 + $0x32c] sm:$0xff]
  %v126 = vld [vmem:[%s2 + $0x334] sm:$0xff]
  %v127 = vld [vmem:[%s2 + $0x33c] sm:$0xff]
  %v128 = vld [vmem:[%s2 + $0x344] sm:$0xf]
  %v129 = vld [vmem:[%s2 + $0x348] sm:$0xff]
  %v130 = vld [vmem:[%s2 + $0x350] sm:$0xff]
  %v131 = vld [vmem:[%s2 + $0x358] sm:$0xff]
  %v132 = vld [vmem:[%s2 + $0x360] sm:$0xff]
  %v133 = vld [vmem:[%s2 + $0x368] sm:$0xff]
  %v134 = vld [vmem:[%s2 + $0x370] sm:$0xff]
  %v135 = vld [vmem:[%s2 + $0x378] sm:$0xff]
  %v136 = vld [vmem:[%s2 + $0x380] sm:$0xff]
  %v137 = vld [vmem:[%s2 + $0x388] sm:$0xff]
  %v138 = vld [vmem:[%s2 + $0x390] sm:$0xff]
  %v139 = vld [vmem:[%s2 + $0x398] sm:$0xf]
  %v140 = vld [vmem:[%s2 + $0x39c] sm:$0xff]
  %v141 = vld [vmem:[%s2 + $0x3a4] sm:$0xff]
  %v142 = vld [vmem:[%s2 + $0x3ac] sm:$0xff]
  %v143 = vld [vmem:[%s2 + $0x3b4] sm:$0xff]
  %v144 = vld [vmem:[%s2 + $0x3bc] sm:$0xff]
  %v145 = vld [vmem:[%s2 + $0x3c4] sm:$0xff]
  %v146 = vld [vmem:[%s2 + $0x3cc] sm:$0xff]
  %v147 = vld [vmem:[%s2 + $0x3d4] sm:$0xff]
  %v148 = vld [vmem:[%s2 + $0x3dc] sm:$0xff]
  %v149 = vld [vmem:[%s2 + $0x3e4] sm:$0xff]
  %v150 = vld [vmem:[%s2 + $0x3ec] sm:$0xf]
  %v151 = vld [vmem:[%s2 + $0x3f0] sm:$0xff]
  %v152 = vld [vmem:[%s2 + $0x3f8] sm:$0xff]
  %v153 = vld [vmem:[%s2 + $0x400] sm:$0xff]
  %v154 = vld [vmem:[%s2 + $0x408] sm:$0xff]
  %v155 = vld [vmem:[%s2 + $0x410] sm:$0xff]
  %v156 = vld [vmem:[%s2 + $0x418] sm:$0xff]
  %v157 = vld [vmem:[%s2 + $0x420] sm:$0xff]
  %v158 = vld [vmem:[%s2 + $0x428] sm:$0xff]
  %v159 = vld [vmem:[%s2 + $0x430] sm:$0xff]
  %v160 = vld [vmem:[%s2 + $0x438] sm:$0xff]
  %v161 = vld [vmem:[%s2 + $0x440] sm:$0xf]
  %v162 = vld [vmem:[%s2 + $0x444] sm:$0xff]
  %v163 = vld [vmem:[%s2 + $0x44c] sm:$0xff]
  %v164 = vld [vmem:[%s2 + $0x454] sm:$0xff]
  %v165 = vld [vmem:[%s2 + $0x45c] sm:$0xff]
  %v166 = vld [vmem:[%s2 + $0x464] sm:$0xff]
  %v167 = vld [vmem:[%s2 + $0x46c] sm:$0xff]
  %v168 = vld [vmem:[%s2 + $0x474] sm:$0xff]
  %v169 = vld [vmem:[%s2 + $0x47c] sm:$0xff]
  %v170 = vld [vmem:[%s2 + $0x484] sm:$0xff]
  %v171 = vld [vmem:[%s2 + $0x48c] sm:$0xff]
  %v172 = vld [vmem:[%s2 + $0x494] sm:$0xf]
  %v173 = vld [vmem:[%s2 + $0x498] sm:$0xff]
  %v174 = vld [vmem:[%s2 + $0x4a0] sm:$0xff]
  %v175 = vld [vmem:[%s2 + $0x4a8] sm:$0xff]
  %v176 = vld [vmem:[%s2 + $0x4b0] sm:$0xff]
  %v177 = vld [vmem:[%s2 + $0x4b8] sm:$0xff]
  %v178 = vld [vmem:[%s2 + $0x4c0] sm:$0xff]
  %v179 = vld [vmem:[%s2 + $0x4c8] sm:$0xff]
  %v180 = vld [vmem:[%s2 + $0x4d0] sm:$0xff]
  %v181 = vld [vmem:[%s2 + $0x4d8] sm:$0xff]
  %v182 = vld [vmem:[%s2 + $0x4e0] sm:$0xff]
  %v183 = vld [vmem:[%s2 + $0x4e8] sm:$0xf]
  %v184 = vld [vmem:[%s2 + $0x4ec] sm:$0xff]
  %v185 = vld [vmem:[%s2 + $0x4f4] sm:$0xff]
  %v186 = vld [vmem:[%s2 + $0x4fc] sm:$0xff]
  %v187 = vld [vmem:[%s2 + $0x504] sm:$0xff]
  %v188 = vld [vmem:[%s2 + $0x50c] sm:$0xff]
  %v189 = vld [vmem:[%s2 + $0x514] sm:$0xff]
  %v190 = vld [vmem:[%s2 + $0x51c] sm:$0xff]
  %v191 = vld [vmem:[%s2 + $0x524] sm:$0xff]
  %v192 = vld [vmem:[%s2 + $0x52c] sm:$0xff]
  %v193 = vld [vmem:[%s2 + $0x534] sm:$0xff]
  %v194 = vld [vmem:[%s2 + $0x53c] sm:$0xf]
  %v195 = vld [vmem:[%s2 + $0x540] sm:$0xff]
  %v196 = vld [vmem:[%s2 + $0x548] sm:$0xff]
  %v197 = vld [vmem:[%s2 + $0x550] sm:$0xff]
  %v198 = vld [vmem:[%s2 + $0x558] sm:$0xff]
  %v199 = vld [vmem:[%s2 + $0x560] sm:$0xff]
  %v200 = vld [vmem:[%s2 + $0x568] sm:$0xff]
  %v201 = vld [vmem:[%s2 + $0x570] sm:$0xff]
  %v202 = vld [vmem:[%s2 + $0x578] sm:$0xff]
  %v203 = vld [vmem:[%s2 + $0x580] sm:$0xff]
  %v204 = vld [vmem:[%s2 + $0x588] sm:$0xff]
  %v205 = vld [vmem:[%s2 + $0x590] sm:$0xf]
  %v206 = vld [vmem:[%s2 + $0x594] sm:$0xff]
  %v207 = vld [vmem:[%s2 + $0x59c] sm:$0xff]
  %v208 = vld [vmem:[%s2 + $0x5a4] sm:$0xff]
  %v209 = vld [vmem:[%s2 + $0x5ac] sm:$0xff]
  %v210 = vld [vmem:[%s2 + $0x5b4] sm:$0xff]
  %v211 = vld [vmem:[%s2 + $0x5bc] sm:$0xff]
  %v212 = vld [vmem:[%s2 + $0x5c4] sm:$0xff]
  %v213 = vld [vmem:[%s2 + $0x5cc] sm:$0xff]
  %v214 = vld [vmem:[%s2 + $0x5d4] sm:$0xff]
  %v215 = vld [vmem:[%s2 + $0x5dc] sm:$0xff]
  %v216 = vld [vmem:[%s2 + $0x5e4] sm:$0xf]
  %v217 = vld [vmem:[%s2 + $0x5e8] sm:$0x11]
  %v218 = vld [vmem:[%s2 + $0x5f0] sm:$0x11]
  %v219 = vld [vmem:[%s2 + $0x5f8] sm:$0x11]
  %v220 = vld [vmem:[%s2 + $0x600] sm:$0x11]
  %v221 = vld [vmem:[%s2 + $0x608] sm:$0x11]
  %v222 = vld [vmem:[%s2 + $0x610] sm:$0x11]
  %v223 = vld [vmem:[%s2 + $0x618] sm:$0x11]
  %v224 = vld [vmem:[%s2 + $0x620] sm:$0x11]
  %v225 = vld [vmem:[%s2 + $0x628] sm:$0x11]
  %v226 = vld [vmem:[%s2 + $0x630] sm:$0x11]
  %v227 = vld [vmem:[%s2 + $0x638] sm:$0x1]
  %v229 = vunpack.c.l.b16 %v18
  %v230 = vunpack.c.h.b16 %v18
  %v231 = vpack.c.b16 %v229, %v229
  %v232 = vpack.c.b16 %v230, %v230
  %v443 = vunpack.c.l.b16 %v19
  %v444 = vunpack.c.h.b16 %v19
  %v445 = vunpack.c.l.b16 %v20
  %v446 = vunpack.c.h.b16 %v20
  %v447 = vunpack.c.l.b16 %v21
  %v448 = vunpack.c.h.b16 %v21
  %v449 = vunpack.c.l.b16 %v22
  %v450 = vunpack.c.h.b16 %v22
  %v451 = vunpack.c.l.b16 %v23
  %v452 = vunpack.c.h.b16 %v23
  %v453 = vunpack.c.l.b16 %v24
  %v454 = vunpack.c.h.b16 %v24
  %v455 = vunpack.c.l.b16 %v25
  %v456 = vunpack.c.h.b16 %v25
  %v457 = vunpack.c.l.b16 %v26
  %v458 = vunpack.c.h.b16 %v26
  %v459 = vunpack.c.l.b16 %v27
  %v460 = vunpack.c.h.b16 %v27
  %v461 = vunpack.c.l.b16 %v28
  %v462 = vunpack.c.h.b16 %v28
  %v463 = vunpack.c.l.b16 %v29
  %v464 = vunpack.c.l.b16 %v30
  %v465 = vunpack.c.h.b16 %v30
  %v466 = vunpack.c.l.b16 %v31
  %v467 = vunpack.c.h.b16 %v31
  %v468 = vunpack.c.l.b16 %v32
  %v469 = vunpack.c.h.b16 %v32
  %v470 = vunpack.c.l.b16 %v33
  %v471 = vunpack.c.h.b16 %v33
  %v472 = vunpack.c.l.b16 %v34
  %v473 = vunpack.c.h.b16 %v34
  %v474 = vunpack.c.l.b16 %v35
  %v475 = vunpack.c.h.b16 %v35
  %v476 = vunpack.c.l.b16 %v36
  %v477 = vunpack.c.h.b16 %v36
  %v478 = vunpack.c.l.b16 %v37
  %v479 = vunpack.c.h.b16 %v37
  %v480 = vunpack.c.l.b16 %v38
  %v481 = vunpack.c.h.b16 %v38
  %v482 = vunpack.c.l.b16 %v39
  %v483 = vunpack.c.h.b16 %v39
  %v484 = vunpack.c.l.b16 %v40
  %v485 = vunpack.c.l.b16 %v41
  %v486 = vunpack.c.h.b16 %v41
  %v487 = vunpack.c.l.b16 %v42
  %v488 = vunpack.c.h.b16 %v42
  %v489 = vunpack.c.l.b16 %v43
  %v490 = vunpack.c.h.b16 %v43
  %v491 = vunpack.c.l.b16 %v44
  %v492 = vunpack.c.h.b16 %v44
  %v493 = vunpack.c.l.b16 %v45
  %v494 = vunpack.c.h.b16 %v45
  %v495 = vunpack.c.l.b16 %v46
  %v496 = vunpack.c.h.b16 %v46
  %v497 = vunpack.c.l.b16 %v47
  %v498 = vunpack.c.h.b16 %v47
  %v499 = vunpack.c.l.b16 %v48
  %v500 = vunpack.c.h.b16 %v48
  %v501 = vunpack.c.l.b16 %v49
  %v502 = vunpack.c.h.b16 %v49
  %v503 = vunpack.c.l.b16 %v50
  %v504 = vunpack.c.h.b16 %v50
  %v505 = vunpack.c.l.b16 %v51
  %v506 = vunpack.c.l.b16 %v52
  %v507 = vunpack.c.h.b16 %v52
  %v508 = vunpack.c.l.b16 %v53
  %v509 = vunpack.c.h.b16 %v53
  %v510 = vunpack.c.l.b16 %v54
  %v511 = vunpack.c.h.b16 %v54
  %v512 = vunpack.c.l.b16 %v55
  %v513 = vunpack.c.h.b16 %v55
  %v514 = vunpack.c.l.b16 %v56
  %v515 = vunpack.c.h.b16 %v56
  %v516 = vunpack.c.l.b16 %v57
  %v517 = vunpack.c.h.b16 %v57
  %v518 = vunpack.c.l.b16 %v58
  %v519 = vunpack.c.h.b16 %v58
  %v520 = vunpack.c.l.b16 %v59
  %v521 = vunpack.c.h.b16 %v59
  %v522 = vunpack.c.l.b16 %v60
  %v523 = vunpack.c.h.b16 %v60
  %v524 = vunpack.c.l.b16 %v61
  %v525 = vunpack.c.h.b16 %v61
  %v526 = vunpack.c.l.b16 %v62
  %v527 = vunpack.c.l.b16 %v63
  %v528 = vunpack.c.h.b16 %v63
  %v529 = vunpack.c.l.b16 %v64
  %v530 = vunpack.c.h.b16 %v64
  %v531 = vunpack.c.l.b16 %v65
  %v532 = vunpack.c.h.b16 %v65
  %v533 = vunpack.c.l.b16 %v66
  %v534 = vunpack.c.h.b16 %v66
  %v535 = vunpack.c.l.b16 %v67
  %v536 = vunpack.c.h.b16 %v67
  %v537 = vunpack.c.l.b16 %v68
  %v538 = vunpack.c.h.b16 %v68
  %v539 = vunpack.c.l.b16 %v69
  %v540 = vunpack.c.h.b16 %v69
  %v541 = vunpack.c.l.b16 %v70
  %v542 = vunpack.c.h.b16 %v70
  %v543 = vunpack.c.l.b16 %v71
  %v544 = vunpack.c.h.b16 %v71
  %v545 = vunpack.c.l.b16 %v72
  %v546 = vunpack.c.h.b16 %v72
  %v547 = vunpack.c.l.b16 %v73
  %v548 = vunpack.c.l.b16 %v74
  %v549 = vunpack.c.h.b16 %v74
  %v550 = vunpack.c.l.b16 %v75
  %v551 = vunpack.c.h.b16 %v75
  %v552 = vunpack.c.l.b16 %v76
  %v553 = vunpack.c.h.b16 %v76
  %v554 = vunpack.c.l.b16 %v77
  %v555 = vunpack.c.h.b16 %v77
  %v556 = vunpack.c.l.b16 %v78
  %v557 = vunpack.c.h.b16 %v78
  %v558 = vunpack.c.l.b16 %v79
  %v559 = vunpack.c.h.b16 %v79
  %v560 = vunpack.c.l.b16 %v80
  %v561 = vunpack.c.h.b16 %v80
  %v562 = vunpack.c.l.b16 %v81
  %v563 = vunpack.c.h.b16 %v81
  %v564 = vunpack.c.l.b16 %v82
  %v565 = vunpack.c.h.b16 %v82
  %v566 = vunpack.c.l.b16 %v83
  %v567 = vunpack.c.h.b16 %v83
  %v568 = vunpack.c.l.b16 %v84
  %v569 = vunpack.c.l.b16 %v85
  %v570 = vunpack.c.h.b16 %v85
  %v571 = vunpack.c.l.b16 %v86
  %v572 = vunpack.c.h.b16 %v86
  %v573 = vunpack.c.l.b16 %v87
  %v574 = vunpack.c.h.b16 %v87
  %v575 = vunpack.c.l.b16 %v88
  %v576 = vunpack.c.h.b16 %v88
  %v577 = vunpack.c.l.b16 %v89
  %v578 = vunpack.c.h.b16 %v89
  %v579 = vunpack.c.l.b16 %v90
  %v580 = vunpack.c.h.b16 %v90
  %v581 = vunpack.c.l.b16 %v91
  %v582 = vunpack.c.h.b16 %v91
  %v583 = vunpack.c.l.b16 %v92
  %v584 = vunpack.c.h.b16 %v92
  %v585 = vunpack.c.l.b16 %v93
  %v586 = vunpack.c.h.b16 %v93
  %v587 = vunpack.c.l.b16 %v94
  %v588 = vunpack.c.h.b16 %v94
  %v589 = vunpack.c.l.b16 %v95
  %v590 = vunpack.c.l.b16 %v96
  %v591 = vunpack.c.h.b16 %v96
  %v592 = vunpack.c.l.b16 %v97
  %v593 = vunpack.c.h.b16 %v97
  %v594 = vunpack.c.l.b16 %v98
  %v595 = vunpack.c.h.b16 %v98
  %v596 = vunpack.c.l.b16 %v99
  %v597 = vunpack.c.h.b16 %v99
  %v598 = vunpack.c.l.b16 %v100
  %v599 = vunpack.c.h.b16 %v100
  %v600 = vunpack.c.l.b16 %v101
  %v601 = vunpack.c.h.b16 %v101
  %v602 = vunpack.c.l.b16 %v102
  %v603 = vunpack.c.h.b16 %v102
  %v604 = vunpack.c.l.b16 %v103
  %v605 = vunpack.c.h.b16 %v103
  %v606 = vunpack.c.l.b16 %v104
  %v607 = vunpack.c.h.b16 %v104
  %v608 = vunpack.c.l.b16 %v105
  %v609 = vunpack.c.h.b16 %v105
  %v610 = vunpack.c.l.b16 %v106
  %v611 = vunpack.c.l.b16 %v107
  %v612 = vunpack.c.h.b16 %v107
  %v613 = vunpack.c.l.b16 %v108
  %v614 = vunpack.c.h.b16 %v108
  %v615 = vunpack.c.l.b16 %v109
  %v616 = vunpack.c.h.b16 %v109
  %v617 = vunpack.c.l.b16 %v110
  %v618 = vunpack.c.h.b16 %v110
  %v619 = vunpack.c.l.b16 %v111
  %v620 = vunpack.c.h.b16 %v111
  %v621 = vunpack.c.l.b16 %v112
  %v622 = vunpack.c.h.b16 %v112
  %v623 = vunpack.c.l.b16 %v113
  %v624 = vunpack.c.h.b16 %v113
  %v625 = vunpack.c.l.b16 %v114
  %v626 = vunpack.c.h.b16 %v114
  %v627 = vunpack.c.l.b16 %v115
  %v628 = vunpack.c.h.b16 %v115
  %v629 = vunpack.c.l.b16 %v116
  %v630 = vunpack.c.h.b16 %v116
  %v631 = vunpack.c.l.b16 %v117
  %v632 = vunpack.c.l.b16 %v118
  %v633 = vunpack.c.h.b16 %v118
  %v634 = vunpack.c.l.b16 %v119
  %v635 = vunpack.c.h.b16 %v119
  %v636 = vunpack.c.l.b16 %v120
  %v637 = vunpack.c.h.b16 %v120
  %v638 = vunpack.c.l.b16 %v121
  %v639 = vunpack.c.h.b16 %v121
  %v640 = vunpack.c.l.b16 %v122
  %v641 = vunpack.c.h.b16 %v122
  %v642 = vunpack.c.l.b16 %v123
  %v643 = vunpack.c.h.b16 %v123
  %v644 = vunpack.c.l.b16 %v124
  %v645 = vunpack.c.h.b16 %v124
  %v646 = vunpack.c.l.b16 %v125
  %v647 = vunpack.c.h.b16 %v125
  %v648 = vunpack.c.l.b16 %v126
  %v649 = vunpack.c.h.b16 %v126
  %v650 = vunpack.c.l.b16 %v127
  %v651 = vunpack.c.h.b16 %v127
  %v652 = vunpack.c.l.b16 %v128
  %v653 = vunpack.c.l.b16 %v129
  %v654 = vunpack.c.h.b16 %v129
  %v655 = vunpack.c.l.b16 %v130
  %v656 = vunpack.c.h.b16 %v130
  %v657 = vunpack.c.l.b16 %v131
  %v658 = vunpack.c.h.b16 %v131
  %v659 = vunpack.c.l.b16 %v132
  %v660 = vunpack.c.h.b16 %v132
  %v661 = vunpack.c.l.b16 %v133
  %v662 = vunpack.c.h.b16 %v133
  %v663 = vunpack.c.l.b16 %v134
  %v664 = vunpack.c.h.b16 %v134
  %v665 = vunpack.c.l.b16 %v135
  %v666 = vunpack.c.h.b16 %v135
  %v667 = vunpack.c.l.b16 %v136
  %v668 = vunpack.c.h.b16 %v136
  %v669 = vunpack.c.l.b16 %v137
  %v670 = vunpack.c.h.b16 %v137
  %v671 = vunpack.c.l.b16 %v138
  %v672 = vunpack.c.h.b16 %v138
  %v673 = vunpack.c.l.b16 %v139
  %v674 = vunpack.c.l.b16 %v140
  %v675 = vunpack.c.h.b16 %v140
  %v676 = vunpack.c.l.b16 %v141
  %v677 = vunpack.c.h.b16 %v141
  %v678 = vunpack.c.l.b16 %v142
  %v679 = vunpack.c.h.b16 %v142
  %v680 = vunpack.c.l.b16 %v143
  %v681 = vunpack.c.h.b16 %v143
  %v682 = vunpack.c.l.b16 %v144
  %v683 = vunpack.c.h.b16 %v144
  %v684 = vunpack.c.l.b16 %v145
  %v685 = vunpack.c.h.b16 %v145
  %v686 = vunpack.c.l.b16 %v146
  %v687 = vunpack.c.h.b16 %v146
  %v688 = vunpack.c.l.b16 %v147
  %v689 = vunpack.c.h.b16 %v147
  %v690 = vunpack.c.l.b16 %v148
  %v691 = vunpack.c.h.b16 %v148
  %v692 = vunpack.c.l.b16 %v149
  %v693 = vunpack.c.h.b16 %v149
  %v694 = vunpack.c.l.b16 %v150
  %v695 = vunpack.c.l.b16 %v151
  %v696 = vunpack.c.h.b16 %v151
  %v697 = vunpack.c.l.b16 %v152
  %v698 = vunpack.c.h.b16 %v152
  %v699 = vunpack.c.l.b16 %v153
  %v700 = vunpack.c.h.b16 %v153
  %v701 = vunpack.c.l.b16 %v154
  %v702 = vunpack.c.h.b16 %v154
  %v703 = vunpack.c.l.b16 %v155
  %v704 = vunpack.c.h.b16 %v155
  %v705 = vunpack.c.l.b16 %v156
  %v706 = vunpack.c.h.b16 %v156
  %v707 = vunpack.c.l.b16 %v157
  %v708 = vunpack.c.h.b16 %v157
  %v709 = vunpack.c.l.b16 %v158
  %v710 = vunpack.c.h.b16 %v158
  %v711 = vunpack.c.l.b16 %v159
  %v712 = vunpack.c.h.b16 %v159
  %v713 = vunpack.c.l.b16 %v160
  %v714 = vunpack.c.h.b16 %v160
  %v715 = vunpack.c.l.b16 %v161
  %v716 = vunpack.c.l.b16 %v162
  %v717 = vunpack.c.h.b16 %v162
  %v718 = vunpack.c.l.b16 %v163
  %v719 = vunpack.c.h.b16 %v163
  %v720 = vunpack.c.l.b16 %v164
  %v721 = vunpack.c.h.b16 %v164
  %v722 = vunpack.c.l.b16 %v165
  %v723 = vunpack.c.h.b16 %v165
  %v724 = vunpack.c.l.b16 %v166
  %v725 = vunpack.c.h.b16 %v166
  %v726 = vunpack.c.l.b16 %v167
  %v727 = vunpack.c.h.b16 %v167
  %v728 = vunpack.c.l.b16 %v168
  %v729 = vunpack.c.h.b16 %v168
  %v730 = vunpack.c.l.b16 %v169
  %v731 = vunpack.c.h.b16 %v169
  %v732 = vunpack.c.l.b16 %v170
  %v733 = vunpack.c.h.b16 %v170
  %v734 = vunpack.c.l.b16 %v171
  %v735 = vunpack.c.h.b16 %v171
  %v736 = vunpack.c.l.b16 %v172
  %v737 = vunpack.c.l.b16 %v173
  %v738 = vunpack.c.h.b16 %v173
  %v739 = vunpack.c.l.b16 %v174
  %v740 = vunpack.c.h.b16 %v174
  %v741 = vunpack.c.l.b16 %v175
  %v742 = vunpack.c.h.b16 %v175
  %v743 = vunpack.c.l.b16 %v176
  %v744 = vunpack.c.h.b16 %v176
  %v745 = vunpack.c.l.b16 %v177
  %v746 = vunpack.c.h.b16 %v177
  %v747 = vunpack.c.l.b16 %v178
  %v748 = vunpack.c.h.b16 %v178
  %v749 = vunpack.c.l.b16 %v179
  %v750 = vunpack.c.h.b16 %v179
  %v751 = vunpack.c.l.b16 %v180
  %v752 = vunpack.c.h.b16 %v180
  %v753 = vunpack.c.l.b16 %v181
  %v754 = vunpack.c.h.b16 %v181
  %v755 = vunpack.c.l.b16 %v182
  %v756 = vunpack.c.h.b16 %v182
  %v757 = vunpack.c.l.b16 %v183
  %v758 = vunpack.c.l.b16 %v184
  %v759 = vunpack.c.h.b16 %v184
  %v760 = vunpack.c.l.b16 %v185
  %v761 = vunpack.c.h.b16 %v185
  %v762 = vunpack.c.l.b16 %v186
  %v763 = vunpack.c.h.b16 %v186
  %v764 = vunpack.c.l.b16 %v187
  %v765 = vunpack.c.h.b16 %v187
  %v766 = vunpack.c.l.b16 %v188
  %v767 = vunpack.c.h.b16 %v188
  %v768 = vunpack.c.l.b16 %v189
  %v769 = vunpack.c.h.b16 %v189
  %v770 = vunpack.c.l.b16 %v190
  %v771 = vunpack.c.h.b16 %v190
  %v772 = vunpack.c.l.b16 %v191
  %v773 = vunpack.c.h.b16 %v191
  %v774 = vunpack.c.l.b16 %v192
  %v775 = vunpack.c.h.b16 %v192
  %v776 = vunpack.c.l.b16 %v193
  %v777 = vunpack.c.h.b16 %v193
  %v778 = vunpack.c.l.b16 %v194
  %v779 = vunpack.c.l.b16 %v195
  %v780 = vunpack.c.h.b16 %v195
  %v781 = vunpack.c.l.b16 %v196
  %v782 = vunpack.c.h.b16 %v196
  %v783 = vunpack.c.l.b16 %v197
  %v784 = vunpack.c.h.b16 %v197
  %v785 = vunpack.c.l.b16 %v198
  %v786 = vunpack.c.h.b16 %v198
  %v787 = vunpack.c.l.b16 %v199
  %v788 = vunpack.c.h.b16 %v199
  %v789 = vunpack.c.l.b16 %v200
  %v790 = vunpack.c.h.b16 %v200
  %v791 = vunpack.c.l.b16 %v201
  %v792 = vunpack.c.h.b16 %v201
  %v793 = vunpack.c.l.b16 %v202
  %v794 = vunpack.c.h.b16 %v202
  %v795 = vunpack.c.l.b16 %v203
  %v796 = vunpack.c.h.b16 %v203
  %v797 = vunpack.c.l.b16 %v204
  %v798 = vunpack.c.h.b16 %v204
  %v799 = vunpack.c.l.b16 %v205
  %v800 = vunpack.c.l.b16 %v206
  %v801 = vunpack.c.h.b16 %v206
  %v802 = vunpack.c.l.b16 %v207
  %v803 = vunpack.c.h.b16 %v207
  %v804 = vunpack.c.l.b16 %v208
  %v805 = vunpack.c.h.b16 %v208
  %v806 = vunpack.c.l.b16 %v209
  %v807 = vunpack.c.h.b16 %v209
  %v808 = vunpack.c.l.b16 %v210
  %v809 = vunpack.c.h.b16 %v210
  %v810 = vunpack.c.l.b16 %v211
  %v811 = vunpack.c.h.b16 %v211
  %v812 = vunpack.c.l.b16 %v212
  %v813 = vunpack.c.h.b16 %v212
  %v814 = vunpack.c.l.b16 %v213
  %v815 = vunpack.c.h.b16 %v213
  %v816 = vunpack.c.l.b16 %v214
  %v817 = vunpack.c.h.b16 %v214
  %v818 = vunpack.c.l.b16 %v215
  %v819 = vunpack.c.h.b16 %v215
  %v820 = vunpack.c.l.b16 %v216
  %v821 = vunpack.c.l.b16 %v217
  %v822 = vunpack.c.h.b16 %v217
  %v823 = vunpack.c.l.b16 %v218
  %v824 = vunpack.c.h.b16 %v218
  %v825 = vunpack.c.l.b16 %v219
  %v826 = vunpack.c.h.b16 %v219
  %v827 = vunpack.c.l.b16 %v220
  %v828 = vunpack.c.h.b16 %v220
  %v829 = vunpack.c.l.b16 %v221
  %v830 = vunpack.c.h.b16 %v221
  %v831 = vunpack.c.l.b16 %v222
  %v832 = vunpack.c.h.b16 %v222
  %v833 = vunpack.c.l.b16 %v223
  %v834 = vunpack.c.h.b16 %v223
  %v835 = vunpack.c.l.b16 %v224
  %v836 = vunpack.c.h.b16 %v224
  %v837 = vunpack.c.l.b16 %v225
  %v838 = vunpack.c.h.b16 %v225
  %v839 = vunpack.c.l.b16 %v226
  %v840 = vunpack.c.h.b16 %v226
  %v841 = vunpack.c.l.b16 %v227
  %v842 = vpack.c.b16 %v464, %v443
  %v843 = vpack.c.b16 %v465, %v444
  %v844 = vpack.c.b16 %v466, %v445
  %v845 = vpack.c.b16 %v467, %v446
  %v846 = vpack.c.b16 %v468, %v447
  %v847 = vpack.c.b16 %v469, %v448
  %v848 = vpack.c.b16 %v470, %v449
  %v849 = vpack.c.b16 %v471, %v450
  %v850 = vpack.c.b16 %v472, %v451
  %v851 = vpack.c.b16 %v473, %v452
  %v852 = vpack.c.b16 %v474, %v453
  %v853 = vpack.c.b16 %v475, %v454
  %v854 = vpack.c.b16 %v476, %v455
  %v855 = vpack.c.b16 %v477, %v456
  %v856 = vpack.c.b16 %v478, %v457
  %v857 = vpack.c.b16 %v479, %v458
  %v858 = vpack.c.b16 %v480, %v459
  %v859 = vpack.c.b16 %v481, %v460
  %v860 = vpack.c.b16 %v482, %v461
  %v861 = vpack.c.b16 %v483, %v462
  %v862 = vpack.c.b16 %v484, %v463
  %v863 = vpack.c.b16 %v506, %v485
  %v864 = vpack.c.b16 %v507, %v486
  %v865 = vpack.c.b16 %v508, %v487
  %v866 = vpack.c.b16 %v509, %v488
  %v867 = vpack.c.b16 %v510, %v489
  %v868 = vpack.c.b16 %v511, %v490
  %v869 = vpack.c.b16 %v512, %v491
  %v870 = vpack.c.b16 %v513, %v492
  %v871 = vpack.c.b16 %v514, %v493
  %v872 = vpack.c.b16 %v515, %v494
  %v873 = vpack.c.b16 %v516, %v495
  %v874 = vpack.c.b16 %v517, %v496
  %v875 = vpack.c.b16 %v518, %v497
  %v876 = vpack.c.b16 %v519, %v498
  %v877 = vpack.c.b16 %v520, %v499
  %v878 = vpack.c.b16 %v521, %v500
  %v879 = vpack.c.b16 %v522, %v501
  %v880 = vpack.c.b16 %v523, %v502
  %v881 = vpack.c.b16 %v524, %v503
  %v882 = vpack.c.b16 %v525, %v504
  %v883 = vpack.c.b16 %v526, %v505
  %v884 = vpack.c.b16 %v548, %v527
  %v885 = vpack.c.b16 %v549, %v528
  %v886 = vpack.c.b16 %v550, %v529
  %v887 = vpack.c.b16 %v551, %v530
  %v888 = vpack.c.b16 %v552, %v531
  %v889 = vpack.c.b16 %v553, %v532
  %v890 = vpack.c.b16 %v554, %v533
  %v891 = vpack.c.b16 %v555, %v534
  %v892 = vpack.c.b16 %v556, %v535
  %v893 = vpack.c.b16 %v557, %v536
  %v894 = vpack.c.b16 %v558, %v537
  %v895 = vpack.c.b16 %v559, %v538
  %v896 = vpack.c.b16 %v560, %v539
  %v897 = vpack.c.b16 %v561, %v540
  %v898 = vpack.c.b16 %v562, %v541
  %v899 = vpack.c.b16 %v563, %v542
  %v900 = vpack.c.b16 %v564, %v543
  %v901 = vpack.c.b16 %v565, %v544
  %v902 = vpack.c.b16 %v566, %v545
  %v903 = vpack.c.b16 %v567, %v546
  %v904 = vpack.c.b16 %v568, %v547
  %v905 = vpack.c.b16 %v590, %v569
  %v906 = vpack.c.b16 %v591, %v570
  %v907 = vpack.c.b16 %v592, %v571
  %v908 = vpack.c.b16 %v593, %v572
  %v909 = vpack.c.b16 %v594, %v573
  %v910 = vpack.c.b16 %v595, %v574
  %v911 = vpack.c.b16 %v596, %v575
  %v912 = vpack.c.b16 %v597, %v576
  %v913 = vpack.c.b16 %v598, %v577
  %v914 = vpack.c.b16 %v599, %v578
  %v915 = vpack.c.b16 %v600, %v579
  %v916 = vpack.c.b16 %v601, %v580
  %v917 = vpack.c.b16 %v602, %v581
  %v918 = vpack.c.b16 %v603, %v582
  %v919 = vpack.c.b16 %v604, %v583
  %v920 = vpack.c.b16 %v605, %v584
  %v921 = vpack.c.b16 %v606, %v585
  %v922 = vpack.c.b16 %v607, %v586
  %v923 = vpack.c.b16 %v608, %v587
  %v924 = vpack.c.b16 %v609, %v588
  %v925 = vpack.c.b16 %v610, %v589
  %v926 = vpack.c.b16 %v632, %v611
  %v927 = vpack.c.b16 %v633, %v612
  %v928 = vpack.c.b16 %v634, %v613
  %v929 = vpack.c.b16 %v635, %v614
  %v930 = vpack.c.b16 %v636, %v615
  %v931 = vpack.c.b16 %v637, %v616
  %v932 = vpack.c.b16 %v638, %v617
  %v933 = vpack.c.b16 %v639, %v618
  %v934 = vpack.c.b16 %v640, %v619
  %v935 = vpack.c.b16 %v641, %v620
  %v936 = vpack.c.b16 %v642, %v621
  %v937 = vpack.c.b16 %v643, %v622
  %v938 = vpack.c.b16 %v644, %v623
  %v939 = vpack.c.b16 %v645, %v624
  %v940 = vpack.c.b16 %v646, %v625
  %v941 = vpack.c.b16 %v647, %v626
  %v942 = vpack.c.b16 %v648, %v627
  %v943 = vpack.c.b16 %v649, %v628
  %v944 = vpack.c.b16 %v650, %v629
  %v945 = vpack.c.b16 %v651, %v630
  %v946 = vpack.c.b16 %v652, %v631
  %v947 = vpack.c.b16 %v674, %v653
  %v948 = vpack.c.b16 %v675, %v654
  %v949 = vpack.c.b16 %v676, %v655
  %v950 = vpack.c.b16 %v677, %v656
  %v951 = vpack.c.b16 %v678, %v657
  %v952 = vpack.c.b16 %v679, %v658
  %v953 = vpack.c.b16 %v680, %v659
  %v954 = vpack.c.b16 %v681, %v660
  %v955 = vpack.c.b16 %v682, %v661
  %v956 = vpack.c.b16 %v683, %v662
  %v957 = vpack.c.b16 %v684, %v663
  %v958 = vpack.c.b16 %v685, %v664
  %v959 = vpack.c.b16 %v686, %v665
  %v960 = vpack.c.b16 %v687, %v666
  %v961 = vpack.c.b16 %v688, %v667
  %v962 = vpack.c.b16 %v689, %v668
  %v963 = vpack.c.b16 %v690, %v669
  %v964 = vpack.c.b16 %v691, %v670
  %v965 = vpack.c.b16 %v692, %v671
  %v966 = vpack.c.b16 %v693, %v672
  %v967 = vpack.c.b16 %v694, %v673
  %v968 = vpack.c.b16 %v716, %v695
  %v969 = vpack.c.b16 %v717, %v696
  %v970 = vpack.c.b16 %v718, %v697
  %v971 = vpack.c.b16 %v719, %v698
  %v972 = vpack.c.b16 %v720, %v699
  %v973 = vpack.c.b16 %v721, %v700
  %v974 = vpack.c.b16 %v722, %v701
  %v975 = vpack.c.b16 %v723, %v702
  %v976 = vpack.c.b16 %v724, %v703
  %v977 = vpack.c.b16 %v725, %v704
  %v978 = vpack.c.b16 %v726, %v705
  %v979 = vpack.c.b16 %v727, %v706
  %v980 = vpack.c.b16 %v728, %v707
  %v981 = vpack.c.b16 %v729, %v708
  %v982 = vpack.c.b16 %v730, %v709
  %v983 = vpack.c.b16 %v731, %v710
  %v984 = vpack.c.b16 %v732, %v711
  %v985 = vpack.c.b16 %v733, %v712
  %v986 = vpack.c.b16 %v734, %v713
  %v987 = vpack.c.b16 %v735, %v714
  %v988 = vpack.c.b16 %v736, %v715
  %v989 = vpack.c.b16 %v758, %v737
  %v990 = vpack.c.b16 %v759, %v738
  %v991 = vpack.c.b16 %v760, %v739
  %v992 = vpack.c.b16 %v761, %v740
  %v993 = vpack.c.b16 %v762, %v741
  %v994 = vpack.c.b16 %v763, %v742
  %v995 = vpack.c.b16 %v764, %v743
  %v996 = vpack.c.b16 %v765, %v744
  %v997 = vpack.c.b16 %v766, %v745
  %v998 = vpack.c.b16 %v767, %v746
  %v999 = vpack.c.b16 %v768, %v747
  %v1000 = vpack.c.b16 %v769, %v748
  %v1001 = vpack.c.b16 %v770, %v749
  %v1002 = vpack.c.b16 %v771, %v750
  %v1003 = vpack.c.b16 %v772, %v751
  %v1004 = vpack.c.b16 %v773, %v752
  %v1005 = vpack.c.b16 %v774, %v753
  %v1006 = vpack.c.b16 %v775, %v754
  %v1007 = vpack.c.b16 %v776, %v755
  %v1008 = vpack.c.b16 %v777, %v756
  %v1009 = vpack.c.b16 %v778, %v757
  %v1010 = vpack.c.b16 %v800, %v779
  %v1011 = vpack.c.b16 %v801, %v780
  %v1012 = vpack.c.b16 %v802, %v781
  %v1013 = vpack.c.b16 %v803, %v782
  %v1014 = vpack.c.b16 %v804, %v783
  %v1015 = vpack.c.b16 %v805, %v784
  %v1016 = vpack.c.b16 %v806, %v785
  %v1017 = vpack.c.b16 %v807, %v786
  %v1018 = vpack.c.b16 %v808, %v787
  %v1019 = vpack.c.b16 %v809, %v788
  %v1020 = vpack.c.b16 %v810, %v789
  %v1021 = vpack.c.b16 %v811, %v790
  %v1022 = vpack.c.b16 %v812, %v791
  %v1023 = vpack.c.b16 %v813, %v792
  %v1024 = vpack.c.b16 %v814, %v793
  %v1025 = vpack.c.b16 %v815, %v794
  %v1026 = vpack.c.b16 %v816, %v795
  %v1027 = vpack.c.b16 %v817, %v796
  %v1028 = vpack.c.b16 %v818, %v797
  %v1029 = vpack.c.b16 %v819, %v798
  %v1030 = vpack.c.b16 %v820, %v799
  %v1031 = vpack.c.b16 %v821, %v821
  %v1032 = vpack.c.b16 %v822, %v822
  %v1033 = vpack.c.b16 %v823, %v823
  %v1034 = vpack.c.b16 %v824, %v824
  %v1035 = vpack.c.b16 %v825, %v825
  %v1036 = vpack.c.b16 %v826, %v826
  %v1037 = vpack.c.b16 %v827, %v827
  %v1038 = vpack.c.b16 %v828, %v828
  %v1039 = vpack.c.b16 %v829, %v829
  %v1040 = vpack.c.b16 %v830, %v830
  %v1041 = vpack.c.b16 %v831, %v831
  %v1042 = vpack.c.b16 %v832, %v832
  %v1043 = vpack.c.b16 %v833, %v833
  %v1044 = vpack.c.b16 %v834, %v834
  %v1045 = vpack.c.b16 %v835, %v835
  %v1046 = vpack.c.b16 %v836, %v836
  %v1047 = vpack.c.b16 %v837, %v837
  %v1048 = vpack.c.b16 %v838, %v838
  %v1049 = vpack.c.b16 %v839, %v839
  %v1050 = vpack.c.b16 %v840, %v840
  %v1051 = vpack.c.b16 %v841, %v841
  %vm1241 = vcmask 146432
  %v1243 = vsel %vm1241, %v232, 0
  %vm1245 = vcmask 1040384
  %v1247 = vsel %vm1245, %v1031, 0
  %v1250 = vsel %vm1245, %v1032, 0
  %v1253 = vsel %vm1245, %v1033, 0
  %v1256 = vsel %vm1245, %v1034, 0
  %v1259 = vsel %vm1245, %v1035, 0
  %v1262 = vsel %vm1245, %v1036, 0
  %v1265 = vsel %vm1245, %v1037, 0
  %v1268 = vsel %vm1245, %v1038, 0
  %v1271 = vsel %vm1245, %v1039, 0
  %v1274 = vsel %vm1245, %v1040, 0
  %v1277 = vsel %vm1245, %v1041, 0
  %v1280 = vsel %vm1245, %v1042, 0
  %v1283 = vsel %vm1245, %v1043, 0
  %v1286 = vsel %vm1245, %v1044, 0
  %v1289 = vsel %vm1245, %v1045, 0
  %v1292 = vsel %vm1245, %v1046, 0
  %v1295 = vsel %vm1245, %v1047, 0
  %v1298 = vsel %vm1245, %v1048, 0
  %v1301 = vsel %vm1245, %v1049, 0
  %v1304 = vsel %vm1245, %v1050, 0
  %v1307 = vsel %vm1245, %v1051, 0
  %1309 = vmatprep.subr.bf16.mxu0 %v843
  %1310 = vmatpush1.bf16.msra.mxu0 %v842
  %1311 = vmatprep.subr.bf16.mxu0 %v864
  %1312 = vmatpush1.bf16.msra.mxu0 %v863
  %1313 = vmatprep.subr.bf16.mxu0 %v885
  %1314 = vmatpush1.bf16.msra.mxu0 %v884
  %1315 = vmatprep.subr.bf16.mxu0 %v906
  %1316 = vmatpush1.bf16.msra.mxu0 %v905
  %1317 = vmatprep.subr.bf16.mxu0 %v927
  %1318 = vmatpush1.bf16.msra.mxu0 %v926
  %1319 = vmatprep.subr.bf16.mxu0 %v948
  %1320 = vmatpush1.bf16.msra.mxu0 %v947
  %1321 = vmatprep.subr.bf16.mxu0 %v969
  %1322 = vmatpush1.bf16.msra.mxu0 %v968
  %1323 = vmatprep.subr.bf16.mxu0 %v990
  %1324 = vmatpush1.bf16.msra.mxu0 %v989
  %1325 = vmatprep.subr.bf16.mxu0 %v1011
  %1326 = vmatpush1.bf16.msra.mxu0 %v1010
  %1327 = vmatprep.subr.bf16.mxu0 %v1250
  %1328 = vmatpush1.bf16.msra.mxu0 %v1247
  %1329 = vmatprep.subr.bf16.mxu0 0
  %1330 = vmatpush1.bf16.msra.mxu0 0
  %1331 = vmatprep.subr.bf16.mxu0 0
  %1332 = vmatpush1.bf16.msra.mxu0 0
  %1333 = vmatprep.subr.bf16.mxu0 0
  %1334 = vmatpush1.bf16.msra.mxu0 0
  %1335 = vmatprep.subr.bf16.mxu0 0
  %1336 = vmatpush1.bf16.msra.mxu0 0
  %1337 = vmatprep.subr.bf16.mxu0 0
  %1338 = vmatpush1.bf16.msra.mxu0 0
  %1339 = vmatprep.subr.bf16.mxu0 0
  %1340 = vmatpush1.bf16.msra.mxu0 0
  %1341 = vmatprep.mubr.bf16.mxu0 %v1243
  %1342 = vmatmul.mubr.bf16.gmra.mrb[0].mxu0 %v231
  %v1343 = vpop.f32.mrb[0].mxu0
  %v1344 = vadd.f32 0.0, %v1343
  %v1345 = vpop.f32.mrb[0].mxu0
  %v1346 = vadd.f32 0.0, %v1345
  %v1347 = vpop.f32.mrb[0].mxu0
  %v1348 = vpop.f32.mrb[0].mxu0
  %1349 = vdwg.mxu0
  %1350 = vmatprep.subr.bf16.mxu0 %v845
  %1351 = vmatpush1.bf16.msra.mxu0 %v844
  %1352 = vmatprep.subr.bf16.mxu0 %v866
  %1353 = vmatpush1.bf16.msra.mxu0 %v865
  %1354 = vmatprep.subr.bf16.mxu0 %v887
  %1355 = vmatpush1.bf16.msra.mxu0 %v886
  %1356 = vmatprep.subr.bf16.mxu0 %v908
  %1357 = vmatpush1.bf16.msra.mxu0 %v907
  %1358 = vmatprep.subr.bf16.mxu0 %v929
  %1359 = vmatpush1.bf16.msra.mxu0 %v928
  %1360 = vmatprep.subr.bf16.mxu0 %v950
  %1361 = vmatpush1.bf16.msra.mxu0 %v949
  %1362 = vmatprep.subr.bf16.mxu0 %v971
  %1363 = vmatpush1.bf16.msra.mxu0 %v970
  %1364 = vmatprep.subr.bf16.mxu0 %v992
  %1365 = vmatpush1.bf16.msra.mxu0 %v991
  %1366 = vmatprep.subr.bf16.mxu0 %v1013
  %1367 = vmatpush1.bf16.msra.mxu0 %v1012
  %1368 = vmatprep.subr.bf16.mxu0 %v1256
  %1369 = vmatpush1.bf16.msra.mxu0 %v1253
  %1370 = vmatprep.subr.bf16.mxu0 0
  %1371 = vmatpush1.bf16.msra.mxu0 0
  %1372 = vmatprep.subr.bf16.mxu0 0
  %1373 = vmatpush1.bf16.msra.mxu0 0
  %1374 = vmatprep.subr.bf16.mxu0 0
  %1375 = vmatpush1.bf16.msra.mxu0 0
  %1376 = vmatprep.subr.bf16.mxu0 0
  %1377 = vmatpush1.bf16.msra.mxu0 0
  %1378 = vmatprep.subr.bf16.mxu0 0
  %1379 = vmatpush1.bf16.msra.mxu0 0
  %1380 = vmatprep.subr.bf16.mxu0 0
  %1381 = vmatpush1.bf16.msra.mxu0 0
  %1382 = vmatprep.mubr.bf16.mxu0 %v1243
  %1383 = vmatmul.mubr.bf16.gmra.mrb[0].mxu0 %v231
  %v1384 = vpop.f32.mrb[0].mxu0
  %v1385 = vadd.f32 0.0, %v1384
  %v1386 = vpop.f32.mrb[0].mxu0
  %v1387 = vadd.f32 0.0, %v1386
  %v1388 = vpop.f32.mrb[0].mxu0
  %v1389 = vpop.f32.mrb[0].mxu0
  %1390 = vdwg.mxu0
  %1391 = vmatprep.subr.bf16.mxu0 %v847
  %1392 = vmatpush1.bf16.msra.mxu0 %v846
  %1393 = vmatprep.subr.bf16.mxu0 %v868
  %1394 = vmatpush1.bf16.msra.mxu0 %v867
  %1395 = vmatprep.subr.bf16.mxu0 %v889
  %1396 = vmatpush1.bf16.msra.mxu0 %v888
  %1397 = vmatprep.subr.bf16.mxu0 %v910
  %1398 = vmatpush1.bf16.msra.mxu0 %v909
  %1399 = vmatprep.subr.bf16.mxu0 %v931
  %1400 = vmatpush1.bf16.msra.mxu0 %v930
  %1401 = vmatprep.subr.bf16.mxu0 %v952
  %1402 = vmatpush1.bf16.msra.mxu0 %v951
  %1403 = vmatprep.subr.bf16.mxu0 %v973
  %1404 = vmatpush1.bf16.msra.mxu0 %v972
  %1405 = vmatprep.subr.bf16.mxu0 %v994
  %1406 = vmatpush1.bf16.msra.mxu0 %v993
  %1407 = vmatprep.subr.bf16.mxu0 %v1015
  %1408 = vmatpush1.bf16.msra.mxu0 %v1014
  %1409 = vmatprep.subr.bf16.mxu0 %v1262
  %1410 = vmatpush1.bf16.msra.mxu0 %v1259
  %1411 = vmatprep.subr.bf16.mxu0 0
  %1412 = vmatpush1.bf16.msra.mxu0 0
  %1413 = vmatprep.subr.bf16.mxu0 0
  %1414 = vmatpush1.bf16.msra.mxu0 0
  %1415 = vmatprep.subr.bf16.mxu0 0
  %1416 = vmatpush1.bf16.msra.mxu0 0
  %1417 = vmatprep.subr.bf16.mxu0 0
  %1418 = vmatpush1.bf16.msra.mxu0 0
  %1419 = vmatprep.subr.bf16.mxu0 0
  %1420 = vmatpush1.bf16.msra.mxu0 0
  %1421 = vmatprep.subr.bf16.mxu0 0
  %1422 = vmatpush1.bf16.msra.mxu0 0
  %1423 = vmatprep.mubr.bf16.mxu0 %v1243
  %1424 = vmatmul.mubr.bf16.gmra.mrb[0].mxu0 %v231
  %v1425 = vpop.f32.mrb[0].mxu0
  %v1426 = vadd.f32 0.0, %v1425
  %v1427 = vpop.f32.mrb[0].mxu0
  %v1428 = vadd.f32 0.0, %v1427
  %v1429 = vpop.f32.mrb[0].mxu0
  %v1430 = vpop.f32.mrb[0].mxu0
  %1431 = vdwg.mxu0
  %1432 = vmatprep.subr.bf16.mxu0 %v849
  %1433 = vmatpush1.bf16.msra.mxu0 %v848
  %1434 = vmatprep.subr.bf16.mxu0 %v870
  %1435 = vmatpush1.bf16.msra.mxu0 %v869
  %1436 = vmatprep.subr.bf16.mxu0 %v891
  %1437 = vmatpush1.bf16.msra.mxu0 %v890
  %1438 = vmatprep.subr.bf16.mxu0 %v912
  %1439 = vmatpush1.bf16.msra.mxu0 %v911
  %1440 = vmatprep.subr.bf16.mxu0 %v933
  %1441 = vmatpush1.bf16.msra.mxu0 %v932
  %1442 = vmatprep.subr.bf16.mxu0 %v954
  %1443 = vmatpush1.bf16.msra.mxu0 %v953
  %1444 = vmatprep.subr.bf16.mxu0 %v975
  %1445 = vmatpush1.bf16.msra.mxu0 %v974
  %1446 = vmatprep.subr.bf16.mxu0 %v996
  %1447 = vmatpush1.bf16.msra.mxu0 %v995
  %1448 = vmatprep.subr.bf16.mxu0 %v1017
  %1449 = vmatpush1.bf16.msra.mxu0 %v1016
  %1450 = vmatprep.subr.bf16.mxu0 %v1268
  %1451 = vmatpush1.bf16.msra.mxu0 %v1265
  %1452 = vmatprep.subr.bf16.mxu0 0
  %1453 = vmatpush1.bf16.msra.mxu0 0
  %1454 = vmatprep.subr.bf16.mxu0 0
  %1455 = vmatpush1.bf16.msra.mxu0 0
  %1456 = vmatprep.subr.bf16.mxu0 0
  %1457 = vmatpush1.bf16.msra.mxu0 0
  %1458 = vmatprep.subr.bf16.mxu0 0
  %1459 = vmatpush1.bf16.msra.mxu0 0
  %1460 = vmatprep.subr.bf16.mxu0 0
  %1461 = vmatpush1.bf16.msra.mxu0 0
  %1462 = vmatprep.subr.bf16.mxu0 0
  %1463 = vmatpush1.bf16.msra.mxu0 0
  %1464 = vmatprep.mubr.bf16.mxu0 %v1243
  %1465 = vmatmul.mubr.bf16.gmra.mrb[0].mxu0 %v231
  %v1466 = vpop.f32.mrb[0].mxu0
  %v1467 = vadd.f32 0.0, %v1466
  %v1468 = vpop.f32.mrb[0].mxu0
  %v1469 = vadd.f32 0.0, %v1468
  %v1470 = vpop.f32.mrb[0].mxu0
  %v1471 = vpop.f32.mrb[0].mxu0
  %1472 = vdwg.mxu0
  %1473 = vmatprep.subr.bf16.mxu0 %v851
  %1474 = vmatpush1.bf16.msra.mxu0 %v850
  %1475 = vmatprep.subr.bf16.mxu0 %v872
  %1476 = vmatpush1.bf16.msra.mxu0 %v871
  %1477 = vmatprep.subr.bf16.mxu0 %v893
  %1478 = vmatpush1.bf16.msra.mxu0 %v892
  %1479 = vmatprep.subr.bf16.mxu0 %v914
  %1480 = vmatpush1.bf16.msra.mxu0 %v913
  %1481 = vmatprep.subr.bf16.mxu0 %v935
  %1482 = vmatpush1.bf16.msra.mxu0 %v934
  %1483 = vmatprep.subr.bf16.mxu0 %v956
  %1484 = vmatpush1.bf16.msra.mxu0 %v955
  %1485 = vmatprep.subr.bf16.mxu0 %v977
  %1486 = vmatpush1.bf16.msra.mxu0 %v976
  %1487 = vmatprep.subr.bf16.mxu0 %v998
  %1488 = vmatpush1.bf16.msra.mxu0 %v997
  %1489 = vmatprep.subr.bf16.mxu0 %v1019
  %1490 = vmatpush1.bf16.msra.mxu0 %v1018
  %1491 = vmatprep.subr.bf16.mxu0 %v1274
  %1492 = vmatpush1.bf16.msra.mxu0 %v1271
  %1493 = vmatprep.subr.bf16.mxu0 0
  %1494 = vmatpush1.bf16.msra.mxu0 0
  %1495 = vmatprep.subr.bf16.mxu0 0
  %1496 = vmatpush1.bf16.msra.mxu0 0
  %1497 = vmatprep.subr.bf16.mxu0 0
  %1498 = vmatpush1.bf16.msra.mxu0 0
  %1499 = vmatprep.subr.bf16.mxu0 0
  %1500 = vmatpush1.bf16.msra.mxu0 0
  %1501 = vmatprep.subr.bf16.mxu0 0
  %1502 = vmatpush1.bf16.msra.mxu0 0
  %1503 = vmatprep.subr.bf16.mxu0 0
  %1504 = vmatpush1.bf16.msra.mxu0 0
  %1505 = vmatprep.mubr.bf16.mxu0 %v1243
  %1506 = vmatmul.mubr.bf16.gmra.mrb[0].mxu0 %v231
  %v1507 = vpop.f32.mrb[0].mxu0
  %v1508 = vadd.f32 0.0, %v1507
  %v1509 = vpop.f32.mrb[0].mxu0
  %v1510 = vadd.f32 0.0, %v1509
  %v1511 = vpop.f32.mrb[0].mxu0
  %v1512 = vpop.f32.mrb[0].mxu0
  %1513 = vdwg.mxu0
  %1514 = vmatprep.subr.bf16.mxu0 %v853
  %1515 = vmatpush1.bf16.msra.mxu0 %v852
  %1516 = vmatprep.subr.bf16.mxu0 %v874
  %1517 = vmatpush1.bf16.msra.mxu0 %v873
  %1518 = vmatprep.subr.bf16.mxu0 %v895
  %1519 = vmatpush1.bf16.msra.mxu0 %v894
  %1520 = vmatprep.subr.bf16.mxu0 %v916
  %1521 = vmatpush1.bf16.msra.mxu0 %v915
  %1522 = vmatprep.subr.bf16.mxu0 %v937
  %1523 = vmatpush1.bf16.msra.mxu0 %v936
  %1524 = vmatprep.subr.bf16.mxu0 %v958
  %1525 = vmatpush1.bf16.msra.mxu0 %v957
  %1526 = vmatprep.subr.bf16.mxu0 %v979
  %1527 = vmatpush1.bf16.msra.mxu0 %v978
  %1528 = vmatprep.subr.bf16.mxu0 %v1000
  %1529 = vmatpush1.bf16.msra.mxu0 %v999
  %1530 = vmatprep.subr.bf16.mxu0 %v1021
  %1531 = vmatpush1.bf16.msra.mxu0 %v1020
  %1532 = vmatprep.subr.bf16.mxu0 %v1280
  %1533 = vmatpush1.bf16.msra.mxu0 %v1277
  %1534 = vmatprep.subr.bf16.mxu0 0
  %1535 = vmatpush1.bf16.msra.mxu0 0
  %1536 = vmatprep.subr.bf16.mxu0 0
  %1537 = vmatpush1.bf16.msra.mxu0 0
  %1538 = vmatprep.subr.bf16.mxu0 0
  %1539 = vmatpush1.bf16.msra.mxu0 0
  %1540 = vmatprep.subr.bf16.mxu0 0
  %1541 = vmatpush1.bf16.msra.mxu0 0
  %1542 = vmatprep.subr.bf16.mxu0 0
  %1543 = vmatpush1.bf16.msra.mxu0 0
  %1544 = vmatprep.subr.bf16.mxu0 0
  %1545 = vmatpush1.bf16.msra.mxu0 0
  %1546 = vmatprep.mubr.bf16.mxu0 %v1243
  %1547 = vmatmul.mubr.bf16.gmra.mrb[0].mxu0 %v231
  %v1548 = vpop.f32.mrb[0].mxu0
  %v1549 = vadd.f32 0.0, %v1548
  %v1550 = vpop.f32.mrb[0].mxu0
  %v1551 = vadd.f32 0.0, %v1550
  %v1552 = vpop.f32.mrb[0].mxu0
  %v1553 = vpop.f32.mrb[0].mxu0
  %1554 = vdwg.mxu0
  %1555 = vmatprep.subr.bf16.mxu0 %v855
  %1556 = vmatpush1.bf16.msra.mxu0 %v854
  %1557 = vmatprep.subr.bf16.mxu0 %v876
  %1558 = vmatpush1.bf16.msra.mxu0 %v875
  %1559 = vmatprep.subr.bf16.mxu0 %v897
  %1560 = vmatpush1.bf16.msra.mxu0 %v896
  %1561 = vmatprep.subr.bf16.mxu0 %v918
  %1562 = vmatpush1.bf16.msra.mxu0 %v917
  %1563 = vmatprep.subr.bf16.mxu0 %v939
  %1564 = vmatpush1.bf16.msra.mxu0 %v938
  %1565 = vmatprep.subr.bf16.mxu0 %v960
  %1566 = vmatpush1.bf16.msra.mxu0 %v959
  %1567 = vmatprep.subr.bf16.mxu0 %v981
  %1568 = vmatpush1.bf16.msra.mxu0 %v980
  %1569 = vmatprep.subr.bf16.mxu0 %v1002
  %1570 = vmatpush1.bf16.msra.mxu0 %v1001
  %1571 = vmatprep.subr.bf16.mxu0 %v1023
  %1572 = vmatpush1.bf16.msra.mxu0 %v1022
  %1573 = vmatprep.subr.bf16.mxu0 %v1286
  %1574 = vmatpush1.bf16.msra.mxu0 %v1283
  %1575 = vmatprep.subr.bf16.mxu0 0
  %1576 = vmatpush1.bf16.msra.mxu0 0
  %1577 = vmatprep.subr.bf16.mxu0 0
  %1578 = vmatpush1.bf16.msra.mxu0 0
  %1579 = vmatprep.subr.bf16.mxu0 0
  %1580 = vmatpush1.bf16.msra.mxu0 0
  %1581 = vmatprep.subr.bf16.mxu0 0
  %1582 = vmatpush1.bf16.msra.mxu0 0
  %1583 = vmatprep.subr.bf16.mxu0 0
  %1584 = vmatpush1.bf16.msra.mxu0 0
  %1585 = vmatprep.subr.bf16.mxu0 0
  %1586 = vmatpush1.bf16.msra.mxu0 0
  %1587 = vmatprep.mubr.bf16.mxu0 %v1243
  %1588 = vmatmul.mubr.bf16.gmra.mrb[0].mxu0 %v231
  %v1589 = vpop.f32.mrb[0].mxu0
  %v1590 = vadd.f32 0.0, %v1589
  %v1591 = vpop.f32.mrb[0].mxu0
  %v1592 = vadd.f32 0.0, %v1591
  %v1593 = vpop.f32.mrb[0].mxu0
  %v1594 = vpop.f32.mrb[0].mxu0
  %1595 = vdwg.mxu0
  %1596 = vmatprep.subr.bf16.mxu0 %v857
  %1597 = vmatpush1.bf16.msra.mxu0 %v856
  %1598 = vmatprep.subr.bf16.mxu0 %v878
  %1599 = vmatpush1.bf16.msra.mxu0 %v877
  %1600 = vmatprep.subr.bf16.mxu0 %v899
  %1601 = vmatpush1.bf16.msra.mxu0 %v898
  %1602 = vmatprep.subr.bf16.mxu0 %v920
  %1603 = vmatpush1.bf16.msra.mxu0 %v919
  %1604 = vmatprep.subr.bf16.mxu0 %v941
  %1605 = vmatpush1.bf16.msra.mxu0 %v940
  %1606 = vmatprep.subr.bf16.mxu0 %v962
  %1607 = vmatpush1.bf16.msra.mxu0 %v961
  %1608 = vmatprep.subr.bf16.mxu0 %v983
  %1609 = vmatpush1.bf16.msra.mxu0 %v982
  %1610 = vmatprep.subr.bf16.mxu0 %v1004
  %1611 = vmatpush1.bf16.msra.mxu0 %v1003
  %1612 = vmatprep.subr.bf16.mxu0 %v1025
  %1613 = vmatpush1.bf16.msra.mxu0 %v1024
  %1614 = vmatprep.subr.bf16.mxu0 %v1292
  %1615 = vmatpush1.bf16.msra.mxu0 %v1289
  %1616 = vmatprep.subr.bf16.mxu0 0
  %1617 = vmatpush1.bf16.msra.mxu0 0
  %1618 = vmatprep.subr.bf16.mxu0 0
  %1619 = vmatpush1.bf16.msra.mxu0 0
  %1620 = vmatprep.subr.bf16.mxu0 0
  %1621 = vmatpush1.bf16.msra.mxu0 0
  %1622 = vmatprep.subr.bf16.mxu0 0
  %1623 = vmatpush1.bf16.msra.mxu0 0
  %1624 = vmatprep.subr.bf16.mxu0 0
  %1625 = vmatpush1.bf16.msra.mxu0 0
  %1626 = vmatprep.subr.bf16.mxu0 0
  %1627 = vmatpush1.bf16.msra.mxu0 0
  %1628 = vmatprep.mubr.bf16.mxu0 %v1243
  %1629 = vmatmul.mubr.bf16.gmra.mrb[0].mxu0 %v231
  %v1630 = vpop.f32.mrb[0].mxu0
  %v1631 = vadd.f32 0.0, %v1630
  %v1632 = vpop.f32.mrb[0].mxu0
  %v1633 = vadd.f32 0.0, %v1632
  %v1634 = vpop.f32.mrb[0].mxu0
  %v1635 = vpop.f32.mrb[0].mxu0
  %1636 = vdwg.mxu0
  %1637 = vmatprep.subr.bf16.mxu0 %v859
  %1638 = vmatpush1.bf16.msra.mxu0 %v858
  %1639 = vmatprep.subr.bf16.mxu0 %v880
  %1640 = vmatpush1.bf16.msra.mxu0 %v879
  %1641 = vmatprep.subr.bf16.mxu0 %v901
  %1642 = vmatpush1.bf16.msra.mxu0 %v900
  %1643 = vmatprep.subr.bf16.mxu0 %v922
  %1644 = vmatpush1.bf16.msra.mxu0 %v921
  %1645 = vmatprep.subr.bf16.mxu0 %v943
  %1646 = vmatpush1.bf16.msra.mxu0 %v942
  %1647 = vmatprep.subr.bf16.mxu0 %v964
  %1648 = vmatpush1.bf16.msra.mxu0 %v963
  %1649 = vmatprep.subr.bf16.mxu0 %v985
  %1650 = vmatpush1.bf16.msra.mxu0 %v984
  %1651 = vmatprep.subr.bf16.mxu0 %v1006
  %1652 = vmatpush1.bf16.msra.mxu0 %v1005
  %1653 = vmatprep.subr.bf16.mxu0 %v1027
  %1654 = vmatpush1.bf16.msra.mxu0 %v1026
  %1655 = vmatprep.subr.bf16.mxu0 %v1298
  %1656 = vmatpush1.bf16.msra.mxu0 %v1295
  %1657 = vmatprep.subr.bf16.mxu0 0
  %1658 = vmatpush1.bf16.msra.mxu0 0
  %1659 = vmatprep.subr.bf16.mxu0 0
  %1660 = vmatpush1.bf16.msra.mxu0 0
  %1661 = vmatprep.subr.bf16.mxu0 0
  %1662 = vmatpush1.bf16.msra.mxu0 0
  %1663 = vmatprep.subr.bf16.mxu0 0
  %1664 = vmatpush1.bf16.msra.mxu0 0
  %1665 = vmatprep.subr.bf16.mxu0 0
  %1666 = vmatpush1.bf16.msra.mxu0 0
  %1667 = vmatprep.subr.bf16.mxu0 0
  %1668 = vmatpush1.bf16.msra.mxu0 0
  %1669 = vmatprep.mubr.bf16.mxu0 %v1243
  %1670 = vmatmul.mubr.bf16.gmra.mrb[0].mxu0 %v231
  %v1671 = vpop.f32.mrb[0].mxu0
  %v1672 = vadd.f32 0.0, %v1671
  %v1673 = vpop.f32.mrb[0].mxu0
  %v1674 = vadd.f32 0.0, %v1673
  %v1675 = vpop.f32.mrb[0].mxu0
  %v1676 = vpop.f32.mrb[0].mxu0
  %1677 = vdwg.mxu0
  %1678 = vmatprep.subr.bf16.mxu0 %v861
  %1679 = vmatpush1.bf16.msra.mxu0 %v860
  %1680 = vmatprep.subr.bf16.mxu0 %v882
  %1681 = vmatpush1.bf16.msra.mxu0 %v881
  %1682 = vmatprep.subr.bf16.mxu0 %v903
  %1683 = vmatpush1.bf16.msra.mxu0 %v902
  %1684 = vmatprep.subr.bf16.mxu0 %v924
  %1685 = vmatpush1.bf16.msra.mxu0 %v923
  %1686 = vmatprep.subr.bf16.mxu0 %v945
  %1687 = vmatpush1.bf16.msra.mxu0 %v944
  %1688 = vmatprep.subr.bf16.mxu0 %v966
  %1689 = vmatpush1.bf16.msra.mxu0 %v965
  %1690 = vmatprep.subr.bf16.mxu0 %v987
  %1691 = vmatpush1.bf16.msra.mxu0 %v986
  %1692 = vmatprep.subr.bf16.mxu0 %v1008
  %1693 = vmatpush1.bf16.msra.mxu0 %v1007
  %1694 = vmatprep.subr.bf16.mxu0 %v1029
  %1695 = vmatpush1.bf16.msra.mxu0 %v1028
  %1696 = vmatprep.subr.bf16.mxu0 %v1304
  %1697 = vmatpush1.bf16.msra.mxu0 %v1301
  %1698 = vmatprep.subr.bf16.mxu0 0
  %1699 = vmatpush1.bf16.msra.mxu0 0
  %1700 = vmatprep.subr.bf16.mxu0 0
  %1701 = vmatpush1.bf16.msra.mxu0 0
  %1702 = vmatprep.subr.bf16.mxu0 0
  %1703 = vmatpush1.bf16.msra.mxu0 0
  %1704 = vmatprep.subr.bf16.mxu0 0
  %1705 = vmatpush1.bf16.msra.mxu0 0
  %1706 = vmatprep.subr.bf16.mxu0 0
  %1707 = vmatpush1.bf16.msra.mxu0 0
  %1708 = vmatprep.subr.bf16.mxu0 0
  %1709 = vmatpush1.bf16.msra.mxu0 0
  %1710 = vmatprep.mubr.bf16.mxu0 %v1243
  %1711 = vmatmul.mubr.bf16.gmra.mrb[0].mxu0 %v231
  %v1712 = vpop.f32.mrb[0].mxu0
  %v1713 = vadd.f32 0.0, %v1712
  %v1714 = vpop.f32.mrb[0].mxu0
  %v1715 = vadd.f32 0.0, %v1714
  %v1716 = vpop.f32.mrb[0].mxu0
  %v1717 = vpop.f32.mrb[0].mxu0
  %1718 = vdwg.mxu0
  %1719 = vmatprep.subr.bf16.mxu0 0
  %1720 = vmatpush1.bf16.msra.mxu0 %v862
  %1721 = vmatprep.subr.bf16.mxu0 0
  %1722 = vmatpush1.bf16.msra.mxu0 %v883
  %1723 = vmatprep.subr.bf16.mxu0 0
  %1724 = vmatpush1.bf16.msra.mxu0 %v904
  %1725 = vmatprep.subr.bf16.mxu0 0
  %1726 = vmatpush1.bf16.msra.mxu0 %v925
  %1727 = vmatprep.subr.bf16.mxu0 0
  %1728 = vmatpush1.bf16.msra.mxu0 %v946
  %1729 = vmatprep.subr.bf16.mxu0 0
  %1730 = vmatpush1.bf16.msra.mxu0 %v967
  %1731 = vmatprep.subr.bf16.mxu0 0
  %1732 = vmatpush1.bf16.msra.mxu0 %v988
  %1733 = vmatprep.subr.bf16.mxu0 0
  %1734 = vmatpush1.bf16.msra.mxu0 %v1009
  %1735 = vmatprep.subr.bf16.mxu0 0
  %1736 = vmatpush1.bf16.msra.mxu0 %v1030
  %1737 = vmatprep.subr.bf16.mxu0 0
  %1738 = vmatpush1.bf16.msra.mxu0 %v1307
  %1739 = vmatprep.subr.bf16.mxu0 0
  %1740 = vmatpush1.bf16.msra.mxu0 0
  %1741 = vmatprep.subr.bf16.mxu0 0
  %1742 = vmatpush1.bf16.msra.mxu0 0
  %1743 = vmatprep.subr.bf16.mxu0 0
  %1744 = vmatpush1.bf16.msra.mxu0 0
  %1745 = vmatprep.subr.bf16.mxu0 0
  %1746 = vmatpush1.bf16.msra.mxu0 0
  %1747 = vmatprep.subr.bf16.mxu0 0
  %1748 = vmatpush1.bf16.msra.mxu0 0
  %1749 = vmatprep.subr.bf16.mxu0 0
  %1750 = vmatpush1.bf16.msra.mxu0 0
  %1751 = vmatprep.mubr.bf16.mxu0 %v1243
  %1752 = vmatmul.mubr.bf16.gmra.mrb[0].mxu0 %v231
  %v1753 = vpop.f32.mrb[0].mxu0
  %v1754 = vadd.f32 0.0, %v1753
  %v1755 = vpop.f32.mrb[0].mxu0
  %v1756 = vpop.f32.mrb[0].mxu0
  %v1757 = vpop.f32.mrb[0].mxu0
  %1758 = vdwg.mxu0
  %v1759 = vld [vmem:[%s1] sm:$0xff]
  %v1760 = vld [vmem:[%s1 + $0x8] sm:$0xff]
  %v1761 = vld [vmem:[%s1 + $0x10] sm:$0xff]
  %v1762 = vld [vmem:[%s1 + $0x18] sm:$0xff]
  %v1763 = vld [vmem:[%s1 + $0x20] sm:$0xff]
  %v1764 = vld [vmem:[%s1 + $0x28] sm:$0xff]
  %v1765 = vld [vmem:[%s1 + $0x30] sm:$0xff]
  %v1766 = vld [vmem:[%s1 + $0x38] sm:$0xff]
  %v1767 = vld [vmem:[%s1 + $0x40] sm:$0xff]
  %v1768 = vld [vmem:[%s1 + $0x48] sm:$0xff]
  %v1769 = vld [vmem:[%s1 + $0x50] sm:$0xff]
  %v1770 = vld [vmem:[%s1 + $0x58] sm:$0xff]
  %v1771 = vld [vmem:[%s3] sm:$0xff]
  %v1772 = vld [vmem:[%s3 + $0x8] sm:$0xff]
  %v1773 = vld [vmem:[%s3 + $0x10] sm:$0xff]
  %v1774 = vld [vmem:[%s3 + $0x18] sm:$0xff]
  %v1775 = vld [vmem:[%s3 + $0x20] sm:$0xff]
  %v1776 = vld [vmem:[%s3 + $0x28] sm:$0xff]
  %v1777 = vld [vmem:[%s3 + $0x30] sm:$0xff]
  %v1778 = vld [vmem:[%s3 + $0x38] sm:$0xff]
  %v1779 = vld [vmem:[%s3 + $0x40] sm:$0xff]
  %v1780 = vld [vmem:[%s3 + $0x48] sm:$0xff]
  %v1781 = vld [vmem:[%s3 + $0x50] sm:$0xff]
  %v1782 = vld [vmem:[%s3 + $0x58] sm:$0xff]
  %v1783 = vld [vmem:[%s3 + $0x60] sm:$0xff]
  %v1784 = vld [vmem:[%s3 + $0x68] sm:$0xff]
  %vm1785 = vcmask 130048
  %v1787 = vsel %vm1785, %v1759, 0
  %v1790 = vsel %vm1785, %v1760, 0
  %v1793 = vsel %vm1785, %v1761, 0
  %v1796 = vsel %vm1785, %v1762, 0
  %v1799 = vsel %vm1785, %v1763, 0
  %v1802 = vsel %vm1785, %v1764, 0
  %v1805 = vsel %vm1785, %v1765, 0
  %v1808 = vsel %vm1785, %v1766, 0
  %v1811 = vsel %vm1785, %v1767, 0
  %v1814 = vsel %vm1785, %v1768, 0
  %v1817 = vsel %vm1785, %v1769, 0
  %v1820 = vsel %vm1785, %v1770, 0
  %1822 = vmatprep.subr.mxu0 %v1772
  %1823 = vmatpush1.msra.mxu0 %v1771
  %1824 = vmatprep.subr.mxu0 %v1779
  %1825 = vmatpush1.msra.mxu0 %v1778
  %1826 = vmatprep.subr.mxu0 0.0
  %1827 = vmatpush1.msra.mxu0 0.0
  %1828 = vmatprep.subr.mxu0 0.0
  %1829 = vmatpush1.msra.mxu0 0.0
  %1830 = vmatprep.subr.mxu0 0.0
  %1831 = vmatpush1.msra.mxu0 0.0
  %1832 = vmatprep.subr.mxu0 0.0
  %1833 = vmatpush1.msra.mxu0 0.0
  %1834 = vmatprep.subr.mxu0 0.0
  %1835 = vmatpush1.msra.mxu0 0.0
  %1836 = vmatprep.subr.mxu0 0.0
  %1837 = vmatpush1.msra.mxu0 0.0
  %1838 = vmatprep.subr.mxu0 0.0
  %1839 = vmatpush1.msra.mxu0 0.0
  %1840 = vmatprep.subr.mxu0 0.0
  %1841 = vmatpush1.msra.mxu0 0.0
  %1842 = vmatprep.subr.mxu0 0.0
  %1843 = vmatpush1.msra.mxu0 0.0
  %1844 = vmatprep.subr.mxu0 0.0
  %1845 = vmatpush1.msra.mxu0 0.0
  %1846 = vmatprep.subr.mxu0 0.0
  %1847 = vmatpush1.msra.mxu0 0.0
  %1848 = vmatprep.subr.mxu0 0.0
  %1849 = vmatpush1.msra.mxu0 0.0
  %1850 = vmatprep.subr.mxu0 0.0
  %1851 = vmatpush1.msra.mxu0 0.0
  %1852 = vmatprep.subr.mxu0 0.0
  %1853 = vmatpush1.msra.mxu0 0.0
  %1854 = vmatprep.subr.mxu0 0.0
  %1855 = vmatpush1.msra.mxu0 0.0
  %1856 = vmatprep.subr.mxu0 0.0
  %1857 = vmatpush1.msra.mxu0 0.0
  %1858 = vmatprep.subr.mxu0 0.0
  %1859 = vmatpush1.msra.mxu0 0.0
  %1860 = vmatprep.subr.mxu0 0.0
  %1861 = vmatpush1.msra.mxu0 0.0
  %1862 = vmatprep.subr.mxu0 0.0
  %1863 = vmatpush1.msra.mxu0 0.0
  %1864 = vmatprep.subr.mxu0 0.0
  %1865 = vmatpush1.msra.mxu0 0.0
  %1866 = vmatprep.subr.mxu0 0.0
  %1867 = vmatpush1.msra.mxu0 0.0
  %1868 = vmatprep.subr.mxu0 0.0
  %1869 = vmatpush1.msra.mxu0 0.0
  %1870 = vmatprep.subr.mxu0 0.0
  %1871 = vmatpush1.msra.mxu0 0.0
  %1872 = vmatprep.subr.mxu0 0.0
  %1873 = vmatpush1.msra.mxu0 0.0
  %1874 = vmatprep.subr.mxu0 0.0
  %1875 = vmatpush1.msra.mxu0 0.0
  %1876 = vmatprep.subr.mxu0 0.0
  %1877 = vmatpush1.msra.mxu0 0.0
  %1878 = vmatprep.subr.mxu0 0.0
  %1879 = vmatpush1.msra.mxu0 0.0
  %1880 = vmatprep.subr.mxu0 0.0
  %1881 = vmatpush1.msra.mxu0 0.0
  %1882 = vmatprep.subr.mxu0 0.0
  %1883 = vmatpush1.msra.mxu0 0.0
  %1884 = vmatprep.subr.mxu0 0.0
  %1885 = vmatpush1.msra.mxu0 0.0
  %1886 = vmatprep.mubr.f32.mxu0 0.0
  %1887 = vmatmul.mubr.f32.gmra.mrb[0].mxu0 %v1787
  %v1888 = vpop.f32.mrb[0].mxu0
  %v1889 = vadd.f32 0.0, %v1888
  %v1890 = vpop.f32.mrb[0].mxu0
  %v1891 = vadd.f32 0.0, %v1890
  %1892 = vmatprep.mubr.f32.mxu0 0.0
  %1893 = vmatmul.mubr.f32.gmra.mrb[0].mxu0 %v1790
  %v1894 = vpop.f32.mrb[0].mxu0
  %v1895 = vadd.f32 0.0, %v1894
  %v1896 = vpop.f32.mrb[0].mxu0
  %v1897 = vadd.f32 0.0, %v1896
  %1898 = vmatprep.mubr.f32.mxu0 0.0
  %1899 = vmatmul.mubr.f32.gmra.mrb[0].mxu0 %v1793
  %v1900 = vpop.f32.mrb[0].mxu0
  %v1901 = vadd.f32 0.0, %v1900
  %v1902 = vpop.f32.mrb[0].mxu0
  %v1903 = vadd.f32 0.0, %v1902
  %1904 = vmatprep.mubr.f32.mxu0 0.0
  %1905 = vmatmul.mubr.f32.gmra.mrb[0].mxu0 %v1796
  %v1906 = vpop.f32.mrb[0].mxu0
  %v1907 = vadd.f32 0.0, %v1906
  %v1908 = vpop.f32.mrb[0].mxu0
  %v1909 = vadd.f32 0.0, %v1908
  %1910 = vmatprep.mubr.f32.mxu0 0.0
  %1911 = vmatmul.mubr.f32.gmra.mrb[0].mxu0 %v1799
  %v1912 = vpop.f32.mrb[0].mxu0
  %v1913 = vadd.f32 0.0, %v1912
  %v1914 = vpop.f32.mrb[0].mxu0
  %v1915 = vadd.f32 0.0, %v1914
  %1916 = vmatprep.mubr.f32.mxu0 0.0
  %1917 = vmatmul.mubr.f32.gmra.mrb[0].mxu0 %v1802
  %v1918 = vpop.f32.mrb[0].mxu0
  %v1919 = vadd.f32 0.0, %v1918
  %v1920 = vpop.f32.mrb[0].mxu0
  %v1921 = vadd.f32 0.0, %v1920
  %1922 = vmatprep.mubr.f32.mxu0 0.0
  %1923 = vmatmul.mubr.f32.gmra.mrb[0].mxu0 %v1805
  %v1924 = vpop.f32.mrb[0].mxu0
  %v1925 = vadd.f32 0.0, %v1924
  %v1926 = vpop.f32.mrb[0].mxu0
  %v1927 = vadd.f32 0.0, %v1926
  %1928 = vmatprep.mubr.f32.mxu0 0.0
  %1929 = vmatmul.mubr.f32.gmra.mrb[0].mxu0 %v1808
  %v1930 = vpop.f32.mrb[0].mxu0
  %v1931 = vadd.f32 0.0, %v1930
  %v1932 = vpop.f32.mrb[0].mxu0
  %v1933 = vadd.f32 0.0, %v1932
  %1934 = vmatprep.mubr.f32.mxu0 0.0
  %1935 = vmatmul.mubr.f32.gmra.mrb[0].mxu0 %v1811
  %v1936 = vpop.f32.mrb[0].mxu0
  %v1937 = vadd.f32 0.0, %v1936
  %v1938 = vpop.f32.mrb[0].mxu0
  %v1939 = vadd.f32 0.0, %v1938
  %1940 = vmatprep.mubr.f32.mxu0 0.0
  %1941 = vmatmul.mubr.f32.gmra.mrb[0].mxu0 %v1814
  %v1942 = vpop.f32.mrb[0].mxu0
  %v1943 = vadd.f32 0.0, %v1942
  %v1944 = vpop.f32.mrb[0].mxu0
  %v1945 = vadd.f32 0.0, %v1944
  %1946 = vmatprep.mubr.f32.mxu0 0.0
  %1947 = vmatmul.mubr.f32.gmra.mrb[0].mxu0 %v1817
  %v1948 = vpop.f32.mrb[0].mxu0
  %v1949 = vadd.f32 0.0, %v1948
  %v1950 = vpop.f32.mrb[0].mxu0
  %v1951 = vadd.f32 0.0, %v1950
  %1952 = vmatprep.mubr.f32.mxu0 0.0
  %1953 = vmatmul.mubr.f32.gmra.mrb[0].mxu0 %v1820
  %v1954 = vpop.f32.mrb[0].mxu0
  %v1955 = vadd.f32 0.0, %v1954
  %v1956 = vpop.f32.mrb[0].mxu0
  %v1957 = vadd.f32 0.0, %v1956
  %1958 = vdwg.mxu0
  %1959 = vmatprep.subr.mxu0 %v1774
  %1960 = vmatpush1.msra.mxu0 %v1773
  %1961 = vmatprep.subr.mxu0 %v1781
  %1962 = vmatpush1.msra.mxu0 %v1780
  %1963 = vmatprep.subr.mxu0 0.0
  %1964 = vmatpush1.msra.mxu0 0.0
  %1965 = vmatprep.subr.mxu0 0.0
  %1966 = vmatpush1.msra.mxu0 0.0
  %1967 = vmatprep.subr.mxu0 0.0
  %1968 = vmatpush1.msra.mxu0 0.0
  %1969 = vmatprep.subr.mxu0 0.0
  %1970 = vmatpush1.msra.mxu0 0.0
  %1971 = vmatprep.subr.mxu0 0.0
  %1972 = vmatpush1.msra.mxu0 0.0
  %1973 = vmatprep.subr.mxu0 0.0
  %1974 = vmatpush1.msra.mxu0 0.0
  %1975 = vmatprep.subr.mxu0 0.0
  %1976 = vmatpush1.msra.mxu0 0.0
  %1977 = vmatprep.subr.mxu0 0.0
  %1978 = vmatpush1.msra.mxu0 0.0
  %1979 = vmatprep.subr.mxu0 0.0
  %1980 = vmatpush1.msra.mxu0 0.0
  %1981 = vmatprep.subr.mxu0 0.0
  %1982 = vmatpush1.msra.mxu0 0.0
  %1983 = vmatprep.subr.mxu0 0.0
  %1984 = vmatpush1.msra.mxu0 0.0
  %1985 = vmatprep.subr.mxu0 0.0
  %1986 = vmatpush1.msra.mxu0 0.0
  %1987 = vmatprep.subr.mxu0 0.0
  %1988 = vmatpush1.msra.mxu0 0.0
  %1989 = vmatprep.subr.mxu0 0.0
  %1990 = vmatpush1.msra.mxu0 0.0
  %1991 = vmatprep.subr.mxu0 0.0
  %1992 = vmatpush1.msra.mxu0 0.0
  %1993 = vmatprep.subr.mxu0 0.0
  %1994 = vmatpush1.msra.mxu0 0.0
  %1995 = vmatprep.subr.mxu0 0.0
  %1996 = vmatpush1.msra.mxu0 0.0
  %1997 = vmatprep.subr.mxu0 0.0
  %1998 = vmatpush1.msra.mxu0 0.0
  %1999 = vmatprep.subr.mxu0 0.0
  %2000 = vmatpush1.msra.mxu0 0.0
  %2001 = vmatprep.subr.mxu0 0.0
  %2002 = vmatpush1.msra.mxu0 0.0
  %2003 = vmatprep.subr.mxu0 0.0
  %2004 = vmatpush1.msra.mxu0 0.0
  %2005 = vmatprep.subr.mxu0 0.0
  %2006 = vmatpush1.msra.mxu0 0.0
  %2007 = vmatprep.subr.mxu0 0.0
  %2008 = vmatpush1.msra.mxu0 0.0
  %2009 = vmatprep.subr.mxu0 0.0
  %2010 = vmatpush1.msra.mxu0 0.0
  %2011 = vmatprep.subr.mxu0 0.0
  %2012 = vmatpush1.msra.mxu0 0.0
  %2013 = vmatprep.subr.mxu0 0.0
  %2014 = vmatpush1.msra.mxu0 0.0
  %2015 = vmatprep.subr.mxu0 0.0
  %2016 = vmatpush1.msra.mxu0 0.0
  %2017 = vmatprep.subr.mxu0 0.0
  %2018 = vmatpush1.msra.mxu0 0.0
  %2019 = vmatprep.subr.mxu0 0.0
  %2020 = vmatpush1.msra.mxu0 0.0
  %2021 = vmatprep.subr.mxu0 0.0
  %2022 = vmatpush1.msra.mxu0 0.0
  %2023 = vmatprep.mubr.f32.mxu0 0.0
  %2024 = vmatmul.mubr.f32.gmra.mrb[0].mxu0 %v1787
  %v2025 = vpop.f32.mrb[0].mxu0
  %v2026 = vadd.f32 0.0, %v2025
  %v2027 = vpop.f32.mrb[0].mxu0
  %v2028 = vadd.f32 0.0, %v2027
  %2029 = vmatprep.mubr.f32.mxu0 0.0
  %2030 = vmatmul.mubr.f32.gmra.mrb[0].mxu0 %v1790
  %v2031 = vpop.f32.mrb[0].mxu0
  %v2032 = vadd.f32 0.0, %v2031
  %v2033 = vpop.f32.mrb[0].mxu0
  %v2034 = vadd.f32 0.0, %v2033
  %2035 = vmatprep.mubr.f32.mxu0 0.0
  %2036 = vmatmul.mubr.f32.gmra.mrb[0].mxu0 %v1793
  %v2037 = vpop.f32.mrb[0].mxu0
  %v2038 = vadd.f32 0.0, %v2037
  %v2039 = vpop.f32.mrb[0].mxu0
  %v2040 = vadd.f32 0.0, %v2039
  %2041 = vmatprep.mubr.f32.mxu0 0.0
  %2042 = vmatmul.mubr.f32.gmra.mrb[0].mxu0 %v1796
  %v2043 = vpop.f32.mrb[0].mxu0
  %v2044 = vadd.f32 0.0, %v2043
  %v2045 = vpop.f32.mrb[0].mxu0
  %v2046 = vadd.f32 0.0, %v2045
  %2047 = vmatprep.mubr.f32.mxu0 0.0
  %2048 = vmatmul.mubr.f32.gmra.mrb[0].mxu0 %v1799
  %v2049 = vpop.f32.mrb[0].mxu0
  %v2050 = vadd.f32 0.0, %v2049
  %v2051 = vpop.f32.mrb[0].mxu0
  %v2052 = vadd.f32 0.0, %v2051
  %2053 = vmatprep.mubr.f32.mxu0 0.0
  %2054 = vmatmul.mubr.f32.gmra.mrb[0].mxu0 %v1802
  %v2055 = vpop.f32.mrb[0].mxu0
  %v2056 = vadd.f32 0.0, %v2055
  %v2057 = vpop.f32.mrb[0].mxu0
  %v2058 = vadd.f32 0.0, %v2057
  %2059 = vmatprep.mubr.f32.mxu0 0.0
  %2060 = vmatmul.mubr.f32.gmra.mrb[0].mxu0 %v1805
  %v2061 = vpop.f32.mrb[0].mxu0
  %v2062 = vadd.f32 0.0, %v2061
  %v2063 = vpop.f32.mrb[0].mxu0
  %v2064 = vadd.f32 0.0, %v2063
  %2065 = vmatprep.mubr.f32.mxu0 0.0
  %2066 = vmatmul.mubr.f32.gmra.mrb[0].mxu0 %v1808
  %v2067 = vpop.f32.mrb[0].mxu0
  %v2068 = vadd.f32 0.0, %v2067
  %v2069 = vpop.f32.mrb[0].mxu0
  %v2070 = vadd.f32 0.0, %v2069
  %2071 = vmatprep.mubr.f32.mxu0 0.0
  %2072 = vmatmul.mubr.f32.gmra.mrb[0].mxu0 %v1811
  %v2073 = vpop.f32.mrb[0].mxu0
  %v2074 = vadd.f32 0.0, %v2073
  %v2075 = vpop.f32.mrb[0].mxu0
  %v2076 = vadd.f32 0.0, %v2075
  %2077 = vmatprep.mubr.f32.mxu0 0.0
  %2078 = vmatmul.mubr.f32.gmra.mrb[0].mxu0 %v1814
  %v2079 = vpop.f32.mrb[0].mxu0
  %v2080 = vadd.f32 0.0, %v2079
  %v2081 = vpop.f32.mrb[0].mxu0
  %v2082 = vadd.f32 0.0, %v2081
  %2083 = vmatprep.mubr.f32.mxu0 0.0
  %2084 = vmatmul.mubr.f32.gmra.mrb[0].mxu0 %v1817
  %v2085 = vpop.f32.mrb[0].mxu0
  %v2086 = vadd.f32 0.0, %v2085
  %v2087 = vpop.f32.mrb[0].mxu0
  %v2088 = vadd.f32 0.0, %v2087
  %2089 = vmatprep.mubr.f32.mxu0 0.0
  %2090 = vmatmul.mubr.f32.gmra.mrb[0].mxu0 %v1820
  %v2091 = vpop.f32.mrb[0].mxu0
  %v2092 = vadd.f32 0.0, %v2091
  %v2093 = vpop.f32.mrb[0].mxu0
  %v2094 = vadd.f32 0.0, %v2093
  %2095 = vdwg.mxu0
  %2096 = vmatprep.subr.mxu0 %v1776
  %2097 = vmatpush1.msra.mxu0 %v1775
  %2098 = vmatprep.subr.mxu0 %v1783
  %2099 = vmatpush1.msra.mxu0 %v1782
  %2100 = vmatprep.subr.mxu0 0.0
  %2101 = vmatpush1.msra.mxu0 0.0
  %2102 = vmatprep.subr.mxu0 0.0
  %2103 = vmatpush1.msra.mxu0 0.0
  %2104 = vmatprep.subr.mxu0 0.0
  %2105 = vmatpush1.msra.mxu0 0.0
  %2106 = vmatprep.subr.mxu0 0.0
  %2107 = vmatpush1.msra.mxu0 0.0
  %2108 = vmatprep.subr.mxu0 0.0
  %2109 = vmatpush1.msra.mxu0 0.0
  %2110 = vmatprep.subr.mxu0 0.0
  %2111 = vmatpush1.msra.mxu0 0.0
  %2112 = vmatprep.subr.mxu0 0.0
  %2113 = vmatpush1.msra.mxu0 0.0
  %2114 = vmatprep.subr.mxu0 0.0
  %2115 = vmatpush1.msra.mxu0 0.0
  %2116 = vmatprep.subr.mxu0 0.0
  %2117 = vmatpush1.msra.mxu0 0.0
  %2118 = vmatprep.subr.mxu0 0.0
  %2119 = vmatpush1.msra.mxu0 0.0
  %2120 = vmatprep.subr.mxu0 0.0
  %2121 = vmatpush1.msra.mxu0 0.0
  %2122 = vmatprep.subr.mxu0 0.0
  %2123 = vmatpush1.msra.mxu0 0.0
  %2124 = vmatprep.subr.mxu0 0.0
  %2125 = vmatpush1.msra.mxu0 0.0
  %2126 = vmatprep.subr.mxu0 0.0
  %2127 = vmatpush1.msra.mxu0 0.0
  %2128 = vmatprep.subr.mxu0 0.0
  %2129 = vmatpush1.msra.mxu0 0.0
  %2130 = vmatprep.subr.mxu0 0.0
  %2131 = vmatpush1.msra.mxu0 0.0
  %2132 = vmatprep.subr.mxu0 0.0
  %2133 = vmatpush1.msra.mxu0 0.0
  %2134 = vmatprep.subr.mxu0 0.0
  %2135 = vmatpush1.msra.mxu0 0.0
  %2136 = vmatprep.subr.mxu0 0.0
  %2137 = vmatpush1.msra.mxu0 0.0
  %2138 = vmatprep.subr.mxu0 0.0
  %2139 = vmatpush1.msra.mxu0 0.0
  %2140 = vmatprep.subr.mxu0 0.0
  %2141 = vmatpush1.msra.mxu0 0.0
  %2142 = vmatprep.subr.mxu0 0.0
  %2143 = vmatpush1.msra.mxu0 0.0
  %2144 = vmatprep.subr.mxu0 0.0
  %2145 = vmatpush1.msra.mxu0 0.0
  %2146 = vmatprep.subr.mxu0 0.0
  %2147 = vmatpush1.msra.mxu0 0.0
  %2148 = vmatprep.subr.mxu0 0.0
  %2149 = vmatpush1.msra.mxu0 0.0
  %2150 = vmatprep.subr.mxu0 0.0
  %2151 = vmatpush1.msra.mxu0 0.0
  %2152 = vmatprep.subr.mxu0 0.0
  %2153 = vmatpush1.msra.mxu0 0.0
  %2154 = vmatprep.subr.mxu0 0.0
  %2155 = vmatpush1.msra.mxu0 0.0
  %2156 = vmatprep.subr.mxu0 0.0
  %2157 = vmatpush1.msra.mxu0 0.0
  %2158 = vmatprep.subr.mxu0 0.0
  %2159 = vmatpush1.msra.mxu0 0.0
  %2160 = vmatprep.mubr.f32.mxu0 0.0
  %2161 = vmatmul.mubr.f32.gmra.mrb[0].mxu0 %v1787
  %v2162 = vpop.f32.mrb[0].mxu0
  %v2163 = vadd.f32 0.0, %v2162
  %v2164 = vpop.f32.mrb[0].mxu0
  %v2165 = vadd.f32 0.0, %v2164
  %2166 = vmatprep.mubr.f32.mxu0 0.0
  %2167 = vmatmul.mubr.f32.gmra.mrb[0].mxu0 %v1790
  %v2168 = vpop.f32.mrb[0].mxu0
  %v2169 = vadd.f32 0.0, %v2168
  %v2170 = vpop.f32.mrb[0].mxu0
  %v2171 = vadd.f32 0.0, %v2170
  %2172 = vmatprep.mubr.f32.mxu0 0.0
  %2173 = vmatmul.mubr.f32.gmra.mrb[0].mxu0 %v1793
  %v2174 = vpop.f32.mrb[0].mxu0
  %v2175 = vadd.f32 0.0, %v2174
  %v2176 = vpop.f32.mrb[0].mxu0
  %v2177 = vadd.f32 0.0, %v2176
  %2178 = vmatprep.mubr.f32.mxu0 0.0
  %2179 = vmatmul.mubr.f32.gmra.mrb[0].mxu0 %v1796
  %v2180 = vpop.f32.mrb[0].mxu0
  %v2181 = vadd.f32 0.0, %v2180
  %v2182 = vpop.f32.mrb[0].mxu0
  %v2183 = vadd.f32 0.0, %v2182
  %2184 = vmatprep.mubr.f32.mxu0 0.0
  %2185 = vmatmul.mubr.f32.gmra.mrb[0].mxu0 %v1799
  %v2186 = vpop.f32.mrb[0].mxu0
  %v2187 = vadd.f32 0.0, %v2186
  %v2188 = vpop.f32.mrb[0].mxu0
  %v2189 = vadd.f32 0.0, %v2188
  %2190 = vmatprep.mubr.f32.mxu0 0.0
  %2191 = vmatmul.mubr.f32.gmra.mrb[0].mxu0 %v1802
  %v2192 = vpop.f32.mrb[0].mxu0
  %v2193 = vadd.f32 0.0, %v2192
  %v2194 = vpop.f32.mrb[0].mxu0
  %v2195 = vadd.f32 0.0, %v2194
  %2196 = vmatprep.mubr.f32.mxu0 0.0
  %2197 = vmatmul.mubr.f32.gmra.mrb[0].mxu0 %v1805
  %v2198 = vpop.f32.mrb[0].mxu0
  %v2199 = vadd.f32 0.0, %v2198
  %v2200 = vpop.f32.mrb[0].mxu0
  %v2201 = vadd.f32 0.0, %v2200
  %2202 = vmatprep.mubr.f32.mxu0 0.0
  %2203 = vmatmul.mubr.f32.gmra.mrb[0].mxu0 %v1808
  %v2204 = vpop.f32.mrb[0].mxu0
  %v2205 = vadd.f32 0.0, %v2204
  %v2206 = vpop.f32.mrb[0].mxu0
  %v2207 = vadd.f32 0.0, %v2206
  %2208 = vmatprep.mubr.f32.mxu0 0.0
  %2209 = vmatmul.mubr.f32.gmra.mrb[0].mxu0 %v1811
  %v2210 = vpop.f32.mrb[0].mxu0
  %v2211 = vadd.f32 0.0, %v2210
  %v2212 = vpop.f32.mrb[0].mxu0
  %v2213 = vadd.f32 0.0, %v2212
  %2214 = vmatprep.mubr.f32.mxu0 0.0
  %2215 = vmatmul.mubr.f32.gmra.mrb[0].mxu0 %v1814
  %v2216 = vpop.f32.mrb[0].mxu0
  %v2217 = vadd.f32 0.0, %v2216
  %v2218 = vpop.f32.mrb[0].mxu0
  %v2219 = vadd.f32 0.0, %v2218
  %2220 = vmatprep.mubr.f32.mxu0 0.0
  %2221 = vmatmul.mubr.f32.gmra.mrb[0].mxu0 %v1817
  %v2222 = vpop.f32.mrb[0].mxu0
  %v2223 = vadd.f32 0.0, %v2222
  %v2224 = vpop.f32.mrb[0].mxu0
  %v2225 = vadd.f32 0.0, %v2224
  %2226 = vmatprep.mubr.f32.mxu0 0.0
  %2227 = vmatmul.mubr.f32.gmra.mrb[0].mxu0 %v1820
  %v2228 = vpop.f32.mrb[0].mxu0
  %v2229 = vadd.f32 0.0, %v2228
  %v2230 = vpop.f32.mrb[0].mxu0
  %v2231 = vadd.f32 0.0, %v2230
  %2232 = vdwg.mxu0
  %2233 = vmatprep.subr.mxu0 0.0
  %2234 = vmatpush1.msra.mxu0 %v1777
  %2235 = vmatprep.subr.mxu0 0.0
  %2236 = vmatpush1.msra.mxu0 %v1784
  %2237 = vmatprep.subr.mxu0 0.0
  %2238 = vmatpush1.msra.mxu0 0.0
  %2239 = vmatprep.subr.mxu0 0.0
  %2240 = vmatpush1.msra.mxu0 0.0
  %2241 = vmatprep.subr.mxu0 0.0
  %2242 = vmatpush1.msra.mxu0 0.0
  %2243 = vmatprep.subr.mxu0 0.0
  %2244 = vmatpush1.msra.mxu0 0.0
  %2245 = vmatprep.subr.mxu0 0.0
  %2246 = vmatpush1.msra.mxu0 0.0
  %2247 = vmatprep.subr.mxu0 0.0
  %2248 = vmatpush1.msra.mxu0 0.0
  %2249 = vmatprep.subr.mxu0 0.0
  %2250 = vmatpush1.msra.mxu0 0.0
  %2251 = vmatprep.subr.mxu0 0.0
  %2252 = vmatpush1.msra.mxu0 0.0
  %2253 = vmatprep.subr.mxu0 0.0
  %2254 = vmatpush1.msra.mxu0 0.0
  %2255 = vmatprep.subr.mxu0 0.0
  %2256 = vmatpush1.msra.mxu0 0.0
  %2257 = vmatprep.subr.mxu0 0.0
  %2258 = vmatpush1.msra.mxu0 0.0
  %2259 = vmatprep.subr.mxu0 0.0
  %2260 = vmatpush1.msra.mxu0 0.0
  %2261 = vmatprep.subr.mxu0 0.0
  %2262 = vmatpush1.msra.mxu0 0.0
  %2263 = vmatprep.subr.mxu0 0.0
  %2264 = vmatpush1.msra.mxu0 0.0
  %2265 = vmatprep.subr.mxu0 0.0
  %2266 = vmatpush1.msra.mxu0 0.0
  %2267 = vmatprep.subr.mxu0 0.0
  %2268 = vmatpush1.msra.mxu0 0.0
  %2269 = vmatprep.subr.mxu0 0.0
  %2270 = vmatpush1.msra.mxu0 0.0
  %2271 = vmatprep.subr.mxu0 0.0
  %2272 = vmatpush1.msra.mxu0 0.0
  %2273 = vmatprep.subr.mxu0 0.0
  %2274 = vmatpush1.msra.mxu0 0.0
  %2275 = vmatprep.subr.mxu0 0.0
  %2276 = vmatpush1.msra.mxu0 0.0
  %2277 = vmatprep.subr.mxu0 0.0
  %2278 = vmatpush1.msra.mxu0 0.0
  %2279 = vmatprep.subr.mxu0 0.0
  %2280 = vmatpush1.msra.mxu0 0.0
  %2281 = vmatprep.subr.mxu0 0.0
  %2282 = vmatpush1.msra.mxu0 0.0
  %2283 = vmatprep.subr.mxu0 0.0
  %2284 = vmatpush1.msra.mxu0 0.0
  %2285 = vmatprep.subr.mxu0 0.0
  %2286 = vmatpush1.msra.mxu0 0.0
  %2287 = vmatprep.subr.mxu0 0.0
  %2288 = vmatpush1.msra.mxu0 0.0
  %2289 = vmatprep.subr.mxu0 0.0
  %2290 = vmatpush1.msra.mxu0 0.0
  %2291 = vmatprep.subr.mxu0 0.0
  %2292 = vmatpush1.msra.mxu0 0.0
  %2293 = vmatprep.subr.mxu0 0.0
  %2294 = vmatpush1.msra.mxu0 0.0
  %2295 = vmatprep.subr.mxu0 0.0
  %2296 = vmatpush1.msra.mxu0 0.0
  %2297 = vmatprep.mubr.f32.mxu0 0.0
  %2298 = vmatmul.mubr.f32.gmra.mrb[0].mxu0 %v1787
  %v2299 = vpop.f32.mrb[0].mxu0
  %v2300 = vadd.f32 0.0, %v2299
  %v2301 = vpop.f32.mrb[0].mxu0
  %2302 = vmatprep.mubr.f32.mxu0 0.0
  %2303 = vmatmul.mubr.f32.gmra.mrb[0].mxu0 %v1790
  %v2304 = vpop.f32.mrb[0].mxu0
  %v2305 = vadd.f32 0.0, %v2304
  %v2306 = vpop.f32.mrb[0].mxu0
  %2307 = vmatprep.mubr.f32.mxu0 0.0
  %2308 = vmatmul.mubr.f32.gmra.mrb[0].mxu0 %v1793
  %v2309 = vpop.f32.mrb[0].mxu0
  %v2310 = vadd.f32 0.0, %v2309
  %v2311 = vpop.f32.mrb[0].mxu0
  %2312 = vmatprep.mubr.f32.mxu0 0.0
  %2313 = vmatmul.mubr.f32.gmra.mrb[0].mxu0 %v1796
  %v2314 = vpop.f32.mrb[0].mxu0
  %v2315 = vadd.f32 0.0, %v2314
  %v2316 = vpop.f32.mrb[0].mxu0
  %2317 = vmatprep.mubr.f32.mxu0 0.0
  %2318 = vmatmul.mubr.f32.gmra.mrb[0].mxu0 %v1799
  %v2319 = vpop.f32.mrb[0].mxu0
  %v2320 = vadd.f32 0.0, %v2319
  %v2321 = vpop.f32.mrb[0].mxu0
  %2322 = vmatprep.mubr.f32.mxu0 0.0
  %2323 = vmatmul.mubr.f32.gmra.mrb[0].mxu0 %v1802
  %v2324 = vpop.f32.mrb[0].mxu0
  %v2325 = vadd.f32 0.0, %v2324
  %v2326 = vpop.f32.mrb[0].mxu0
  %2327 = vmatprep.mubr.f32.mxu0 0.0
  %2328 = vmatmul.mubr.f32.gmra.mrb[0].mxu0 %v1805
  %v2329 = vpop.f32.mrb[0].mxu0
  %v2330 = vadd.f32 0.0, %v2329
  %v2331 = vpop.f32.mrb[0].mxu0
  %2332 = vmatprep.mubr.f32.mxu0 0.0
  %2333 = vmatmul.mubr.f32.gmra.mrb[0].mxu0 %v1808
  %v2334 = vpop.f32.mrb[0].mxu0
  %v2335 = vadd.f32 0.0, %v2334
  %v2336 = vpop.f32.mrb[0].mxu0
  %2337 = vmatprep.mubr.f32.mxu0 0.0
  %2338 = vmatmul.mubr.f32.gmra.mrb[0].mxu0 %v1811
  %v2339 = vpop.f32.mrb[0].mxu0
  %v2340 = vadd.f32 0.0, %v2339
  %v2341 = vpop.f32.mrb[0].mxu0
  %2342 = vmatprep.mubr.f32.mxu0 0.0
  %2343 = vmatmul.mubr.f32.gmra.mrb[0].mxu0 %v1814
  %v2344 = vpop.f32.mrb[0].mxu0
  %v2345 = vadd.f32 0.0, %v2344
  %v2346 = vpop.f32.mrb[0].mxu0
  %2347 = vmatprep.mubr.f32.mxu0 0.0
  %2348 = vmatmul.mubr.f32.gmra.mrb[0].mxu0 %v1817
  %v2349 = vpop.f32.mrb[0].mxu0
  %v2350 = vadd.f32 0.0, %v2349
  %v2351 = vpop.f32.mrb[0].mxu0
  %2352 = vmatprep.mubr.f32.mxu0 0.0
  %2353 = vmatmul.mubr.f32.gmra.mrb[0].mxu0 %v1820
  %v2354 = vpop.f32.mrb[0].mxu0
  %v2355 = vadd.f32 0.0, %v2354
  %v2356 = vpop.f32.mrb[0].mxu0
  %2357 = vdwg.mxu0
  %v2358 = vmul.f32 %v1889, %v1344
  %v2359 = vmul.f32 %v1891, %v1346
  %v2360 = vmul.f32 %v2026, %v1385
  %v2361 = vmul.f32 %v2028, %v1387
  %v2362 = vmul.f32 %v2163, %v1426
  %v2363 = vmul.f32 %v2165, %v1428
  %v2364 = vmul.f32 %v2300, %v1467
  %v2365 = vmul.f32 %v1895, %v1469
  %v2366 = vmul.f32 %v1897, %v1508
  %v2367 = vmul.f32 %v2032, %v1510
  %v2368 = vmul.f32 %v2034, %v1549
  %v2369 = vmul.f32 %v2169, %v1551
  %v2370 = vmul.f32 %v2171, %v1590
  %v2371 = vmul.f32 %v2305, %v1592
  %v2372 = vadd.f32 %v2358, %v2365
  %v2373 = vadd.f32 %v2359, %v2366
  %v2374 = vadd.f32 %v2360, %v2367
  %v2375 = vadd.f32 %v2361, %v2368
  %v2376 = vadd.f32 %v2362, %v2369
  %v2377 = vadd.f32 %v2363, %v2370
  %v2378 = vadd.f32 %v2364, %v2371
  %v2379 = vmul.f32 %v1901, %v1631
  %v2380 = vmul.f32 %v1903, %v1633
  %v2381 = vmul.f32 %v2038, %v1672
  %v2382 = vmul.f32 %v2040, %v1674
  %v2383 = vmul.f32 %v2175, %v1713
  %v2384 = vmul.f32 %v2177, %v1715
  %v2385 = vmul.f32 %v2310, %v1754
  %v2386 = vadd.f32 %v2372, %v2379
  %v2387 = vadd.f32 %v2373, %v2380
  %v2388 = vadd.f32 %v2374, %v2381
  %v2389 = vadd.f32 %v2375, %v2382
  %v2390 = vadd.f32 %v2376, %v2383
  %v2391 = vadd.f32 %v2377, %v2384
  %v2392 = vadd.f32 %v2378, %v2385
  %v2393 = vadd.f32 %v2386, %v1907
  %v2394 = vadd.f32 %v2387, %v1909
  %v2395 = vadd.f32 %v2388, %v2044
  %v2396 = vadd.f32 %v2389, %v2046
  %v2397 = vadd.f32 %v2390, %v2181
  %v2398 = vadd.f32 %v2391, %v2183
  %v2399 = vadd.f32 %v2392, %v2315
  %2400 = vst [vmem:[%s4] sm:$0xff] %v2393
  %2401 = vst [vmem:[%s4 + $0x8] sm:$0xff] %v2394
  %2402 = vst [vmem:[%s4 + $0x10] sm:$0xff] %v2395
  %2403 = vst [vmem:[%s4 + $0x18] sm:$0xff] %v2396
  %2404 = vst [vmem:[%s4 + $0x20] sm:$0xff] %v2397
  %2405 = vst [vmem:[%s4 + $0x28] sm:$0xff] %v2398
  %2406 = vst [vmem:[%s4 + $0x30] sm:$0xff] %v2399
  %v2407 = vmul.f32 %v1913, %v1344
  %v2408 = vmul.f32 %v1915, %v1346
  %v2409 = vmul.f32 %v2050, %v1385
  %v2410 = vmul.f32 %v2052, %v1387
  %v2411 = vmul.f32 %v2187, %v1426
  %v2412 = vmul.f32 %v2189, %v1428
  %v2413 = vmul.f32 %v2320, %v1467
  %v2414 = vmul.f32 %v1919, %v1469
  %v2415 = vmul.f32 %v1921, %v1508
  %v2416 = vmul.f32 %v2056, %v1510
  %v2417 = vmul.f32 %v2058, %v1549
  %v2418 = vmul.f32 %v2193, %v1551
  %v2419 = vmul.f32 %v2195, %v1590
  %v2420 = vmul.f32 %v2325, %v1592
  %v2421 = vadd.f32 %v2407, %v2414
  %v2422 = vadd.f32 %v2408, %v2415
  %v2423 = vadd.f32 %v2409, %v2416
  %v2424 = vadd.f32 %v2410, %v2417
  %v2425 = vadd.f32 %v2411, %v2418
  %v2426 = vadd.f32 %v2412, %v2419
  %v2427 = vadd.f32 %v2413, %v2420
  %v2428 = vmul.f32 %v1925, %v1631
  %v2429 = vmul.f32 %v1927, %v1633
  %v2430 = vmul.f32 %v2062, %v1672
  %v2431 = vmul.f32 %v2064, %v1674
  %v2432 = vmul.f32 %v2199, %v1713
  %v2433 = vmul.f32 %v2201, %v1715
  %v2434 = vmul.f32 %v2330, %v1754
  %v2435 = vadd.f32 %v2421, %v2428
  %v2436 = vadd.f32 %v2422, %v2429
  %v2437 = vadd.f32 %v2423, %v2430
  %v2438 = vadd.f32 %v2424, %v2431
  %v2439 = vadd.f32 %v2425, %v2432
  %v2440 = vadd.f32 %v2426, %v2433
  %v2441 = vadd.f32 %v2427, %v2434
  %v2442 = vadd.f32 %v2435, %v1931
  %v2443 = vadd.f32 %v2436, %v1933
  %v2444 = vadd.f32 %v2437, %v2068
  %v2445 = vadd.f32 %v2438, %v2070
  %v2446 = vadd.f32 %v2439, %v2205
  %v2447 = vadd.f32 %v2440, %v2207
  %v2448 = vadd.f32 %v2441, %v2335
  %2449 = vst [vmem:[%s4 + $0x38] sm:$0xff] %v2442
  %2450 = vst [vmem:[%s4 + $0x40] sm:$0xff] %v2443
  %2451 = vst [vmem:[%s4 + $0x48] sm:$0xff] %v2444
  %2452 = vst [vmem:[%s4 + $0x50] sm:$0xff] %v2445
  %2453 = vst [vmem:[%s4 + $0x58] sm:$0xff] %v2446
  %2454 = vst [vmem:[%s4 + $0x60] sm:$0xff] %v2447
  %2455 = vst [vmem:[%s4 + $0x68] sm:$0xff] %v2448
  %v2456 = vmul.f32 %v1937, %v1344
  %v2457 = vmul.f32 %v1939, %v1346
  %v2458 = vmul.f32 %v2074, %v1385
  %v2459 = vmul.f32 %v2076, %v1387
  %v2460 = vmul.f32 %v2211, %v1426
  %v2461 = vmul.f32 %v2213, %v1428
  %v2462 = vmul.f32 %v2340, %v1467
  %v2463 = vmul.f32 %v1943, %v1469
  %v2464 = vmul.f32 %v1945, %v1508
  %v2465 = vmul.f32 %v2080, %v1510
  %v2466 = vmul.f32 %v2082, %v1549
  %v2467 = vmul.f32 %v2217, %v1551
  %v2468 = vmul.f32 %v2219, %v1590
  %v2469 = vmul.f32 %v2345, %v1592
  %v2470 = vadd.f32 %v2456, %v2463
  %v2471 = vadd.f32 %v2457, %v2464
  %v2472 = vadd.f32 %v2458, %v2465
  %v2473 = vadd.f32 %v2459, %v2466
  %v2474 = vadd.f32 %v2460, %v2467
  %v2475 = vadd.f32 %v2461, %v2468
  %v2476 = vadd.f32 %v2462, %v2469
  %v2477 = vmul.f32 %v1949, %v1631
  %v2478 = vmul.f32 %v1951, %v1633
  %v2479 = vmul.f32 %v2086, %v1672
  %v2480 = vmul.f32 %v2088, %v1674
  %v2481 = vmul.f32 %v2223, %v1713
  %v2482 = vmul.f32 %v2225, %v1715
  %v2483 = vmul.f32 %v2350, %v1754
  %v2484 = vadd.f32 %v2470, %v2477
  %v2485 = vadd.f32 %v2471, %v2478
  %v2486 = vadd.f32 %v2472, %v2479
  %v2487 = vadd.f32 %v2473, %v2480
  %v2488 = vadd.f32 %v2474, %v2481
  %v2489 = vadd.f32 %v2475, %v2482
  %v2490 = vadd.f32 %v2476, %v2483
  %v2491 = vadd.f32 %v2484, %v1955
  %v2492 = vadd.f32 %v2485, %v1957
  %v2493 = vadd.f32 %v2486, %v2092
  %v2494 = vadd.f32 %v2487, %v2094
  %v2495 = vadd.f32 %v2488, %v2229
  %v2496 = vadd.f32 %v2489, %v2231
  %v2497 = vadd.f32 %v2490, %v2355
  %2498 = vst [vmem:[%s4 + $0x70] sm:$0xff] %v2491
  %2499 = vst [vmem:[%s4 + $0x78] sm:$0xff] %v2492
  %2500 = vst [vmem:[%s4 + $0x80] sm:$0xff] %v2493
  %2501 = vst [vmem:[%s4 + $0x88] sm:$0xff] %v2494
  %2502 = vst [vmem:[%s4 + $0x90] sm:$0xff] %v2495
  %2503 = vst [vmem:[%s4 + $0x98] sm:$0xff] %v2496
  %2504 = vst [vmem:[%s4 + $0xa0] sm:$0xff] %v2497
  // Predicated region
  $region18: #{mano_forward_pallas.1} parent=0 // pred_check
    _
  $region19: #{mano_forward_pallas.1} parent=0 // pred_check_branch
    %2506 = sbr.rel (0) target = $region21
  $region20: #{mano_forward_pallas.1} parent=0 // pred_region
    _
  $region21: #{mano_forward_pallas.1} parent=0 // pred_fallthru
    _
  // Predicated region
  $region22: #{mano_forward_pallas.1} parent=0 // pred_check
    _
  $region23: #{mano_forward_pallas.1} parent=0 // pred_check_branch
    %2508 = sbr.rel (0) target = $region25
  $region24: #{mano_forward_pallas.1} parent=0 // pred_region
    _
  $region25: #{mano_forward_pallas.1} parent=0 // pred_fallthru
    _

</llo_original>
